<compile_context>
chip_gen: v6e
topology: v6e:2x2x1
jax: 0.10.0
libtpu: 0.0.40
codegen_flags: <defaults>
</compile_context>

<pallas_src>
import jax
import jax.numpy as jnp
from jax.experimental import pallas as pl
from jax.experimental.pallas import tpu as pltpu

_LOG2 = 0.6931471805599453


def _round_up(n, m):
    return ((n + m - 1) // m) * m


def _default_num_cores():
    """2 TensorCores per chip on v7x, 1 on v5e/v6e."""
    try:
        kind = jax.devices()[0].device_kind.lower()
        return 2 if "v7" in kind else 1
    except Exception:
        return 1


# ---------------------------------------------------------------------------
# Fused kernel: per-plane projection + masked log-cosh / residual reduction
# ---------------------------------------------------------------------------
def _fused_kernel(x_ref, side_ref, w_ref, b_ref, grp_ref, sel_ref,
                  xpos_ref, lc_ref, abs_ref, cnt_ref):
    # init the per-core accumulators at the first inner ("arbitrary") step
    @pl.when(pl.program_id(1) == 0)
    def _():
        lc_ref[...] = jnp.zeros_like(lc_ref)
        abs_ref[...] = jnp.zeros_like(abs_ref)
        cnt_ref[...] = jnp.zeros_like(cnt_ref)

    x = x_ref[...]                           # (T, F)  f32 or bf16
    side = side_ref[...]                     # (T, 8)  f32 packed slab
    ypos = side[:, 0:3]                      # (T, 3)  true coordinates
    plane = side[:, 3:4]                     # (T, 1)  plane index as float
    valid = side[:, 4:5]                     # (T, 1)  1.0 where y_semantic != -1

    # one MXU push of width 3P instead of P pushes of width 3 (bias added after)
    yp_all = jnp.dot(x, w_ref[...],
                     preferred_element_type=jnp.float32) + b_ref[...]   # (T, 3P)

    # select the 3-column group belonging to each row's plane (padding rows are
    # harmless: excluded by valid == 0 and sliced off the output), then sum the
    # groups with a tiny (3P, 8) selection matmul (cols 0:3 = xyz, rest zero).
    masked = jnp.where(grp_ref[...] == plane, yp_all, 0.0)              # (T, 3P)
    xpos8 = jnp.dot(masked, sel_ref[...],
                    preferred_element_type=jnp.float32)                 # (T, 8)

    # lane-dense output store: (3, T).  The transpose is XLU work (idle here).
    xpos_ref[...] = jnp.transpose(xpos8)[0:3, :]

    # masked log-cosh / |residual| reduction
    xpos = xpos8[:, 0:3]                                                # (T, 3)
    d = xpos - ypos
    ad = jnp.abs(d)
    # numerically stable log(cosh(d + 1e-12)) = |d'| + log1p(exp(-2|d'|)) - log 2
    adl = jnp.abs(d + 1e-12)
    lc = adl + jnp.log1p(jnp.exp(-2.0 * adl)) - _LOG2
    # f32 running sums of per-tile partials; fine up to very large N
    # (switch to Kahan / per-step partial outputs if N reaches O(1e8)).
    lc_ref[...] += jnp.sum(lc * valid, axis=0, keepdims=True)[None]     # (1,1,3)
    abs_ref[...] += jnp.sum(ad * valid, axis=0, keepdims=True)[None]    # (1,1,3)
    cnt_ref[...] += jnp.sum(valid, axis=0, keepdims=True)[None]         # (1,1,1)


def _fused_call(x, side, w_all, b_all, grp, sel8, *, tile, cores, x_buffers=2):
    Np, F = x.shape
    threeP = w_all.shape[1]
    nb = Np // (cores * tile)        # inner (reduction) steps per core

    x_spec_kwargs = {}
    if x_buffers != 2:
        # v5e tuning knob: deeper pipeline on the dominant x stream if xprof
        # shows exposed DMA even at the large tile.
        x_spec_kwargs = dict(pipeline_mode=pl.Buffered(x_buffers))
    x_spec = pl.BlockSpec((tile, F), lambda c, i: (c * nb + i, 0), **x_spec_kwargs)

    # VMEM budget (double-buffered): x + packed side slab + lane-dense output
    # (last dims pad to 128 lanes in VMEM).  ~17 MiB at tile=8192, F=32.
    lanes = lambda n: _round_up(n, 128)
    est = 2 * (tile * lanes(F) * x.dtype.itemsize     # x blocks
               + tile * 128 * 4                       # side slab blocks
               + 8 * tile * 4)                        # (3, tile) out blocks
    vmem_limit = min(max(32 * 1024 * 1024, int(1.25 * est)), 56 * 1024 * 1024)

    # node axis split across TensorCores only when we actually have >1 (v7x);
    # plain "parallel" vs "arbitrary" has no measured effect, CORE_PARALLEL does.
    sem0 = pltpu.CORE_PARALLEL if cores > 1 else pltpu.ARBITRARY

    return pl.pallas_call(
        _fused_kernel,
        out_shape=(
            jax.ShapeDtypeStruct((3, Np), jnp.float32),        # x_position^T (lane-dense)
            jax.ShapeDtypeStruct((cores, 1, 3), jnp.float32),  # log-cosh partials
            jax.ShapeDtypeStruct((cores, 1, 3), jnp.float32),  # |residual| partials
            jax.ShapeDtypeStruct((cores, 1, 1), jnp.float32),  # valid-count partials
        ),
        grid_spec=pltpu.PrefetchScalarGridSpec(
            num_scalar_prefetch=0,
            grid=(cores, nb),
            in_specs=[
                x_spec,
                pl.BlockSpec((tile, 8), lambda c, i: (c * nb + i, 0)),
                pl.BlockSpec((F, threeP), lambda c, i: (0, 0)),
                pl.BlockSpec((1, threeP), lambda c, i: (0, 0)),
                pl.BlockSpec((1, threeP), lambda c, i: (0, 0)),
                pl.BlockSpec((threeP, 8), lambda c, i: (0, 0)),
            ],
            out_specs=(
                pl.BlockSpec((3, tile), lambda c, i: (0, c * nb + i)),
                pl.BlockSpec((1, 1, 3), lambda c, i: (c, 0, 0)),
                pl.BlockSpec((1, 1, 3), lambda c, i: (c, 0, 0)),
                pl.BlockSpec((1, 1, 1), lambda c, i: (c, 0, 0)),
            ),
        ),
        compiler_params=pltpu.CompilerParams(
            dimension_semantics=(sem0, pltpu.ARBITRARY),
            vmem_limit_bytes=vmem_limit),
    )(x, side, w_all, b_all, grp, sel8)


# ---------------------------------------------------------------------------
# Forward pass (equivalent of SpacepointDecoder.forward)
# ---------------------------------------------------------------------------
def spacepoint_decoder_forward(params, x, plane, y_semantic, y_position,
                               stage=None, tile=8192, cores=None, x_buffers=2):
    N, F = x.shape
    P = params["w"].shape[0]

    if cores is None:
        cores = _default_num_cores()

    # keep bf16 embeddings bf16 (halves the dominant HBM stream; MXU accumulates
    # in f32).  Never insert a wrapper-side f32->bf16 cast.
    if x.dtype == jnp.bfloat16:
        w_dtype = jnp.bfloat16
    else:
        x = x.astype(jnp.float32)
        w_dtype = jnp.float32

    # pack the three narrow per-hit streams into one lane-packed f32 slab:
    # [y_position(3), plane(1), valid(1), pad(3)] -> one (tile, 8) DMA per step
    plane_f = plane.reshape(N, 1).astype(jnp.float32)
    valid_f = (y_semantic.reshape(N, 1) != -1).astype(jnp.float32)
    side = jnp.concatenate(
        [y_position.astype(jnp.float32), plane_f, valid_f,
         jnp.zeros((N, 3), jnp.float32)], axis=1)                      # (N, 8)

    # adaptive tile: large for big N (amortize per-step overhead), shrunk for
    # small inputs so we don't pad to 8192 rows for a demo-sized graph.
    per_core = -(-N // cores)
    tile = max(256, min(tile, _round_up(per_core, 256)))
    chunk = cores * tile
    pad = (-N) % chunk
    if pad:
        x = jnp.pad(x, ((0, pad), (0, 0)))
        side = jnp.pad(side, ((0, pad), (0, 0)))   # zeros: valid=0, sliced off

    # pack per-plane Linear layers into one (F, 3P) weight / (1, 3P) bias;
    # column j = 3*p + c.
    w_all = jnp.transpose(params["w"], (1, 0, 2)).reshape(F, 3 * P).astype(w_dtype)
    b_all = params["b"].reshape(1, 3 * P).astype(jnp.float32)
    grp = jnp.repeat(jnp.arange(P, dtype=jnp.float32), 3).reshape(1, 3 * P)
    sel8 = jnp.tile(
        jnp.concatenate([jnp.eye(3, dtype=jnp.float32),
                         jnp.zeros((3, 5), jnp.float32)], axis=1), (P, 1))   # (3P, 8)

    xpos_t, lc_p, abs_p, cnt_p = _fused_call(
        x, side, w_all, b_all, grp, sel8,
        tile=tile, cores=cores, x_buffers=x_buffers)

    # back to the module's (N, 3) layout (consumers could take (3, N) directly
    # and skip this small extra pass).
    x_position = jnp.transpose(xpos_t[:, :N])

    cnt = jnp.maximum(jnp.sum(cnt_p), 1.0)            # guard: zero valid hits
    lc_mean = jnp.sum(lc_p) / (cnt * 3.0)             # mean over elements
    temp = params["temp"]
    loss = jnp.exp(-temp) * lc_mean + temp

    metrics = {}
    if stage:
        xyz = jnp.sum(abs_p, axis=(0, 1)) / cnt                       # (3,)
        metrics[f"spacepoint/loss-{stage}"] = loss
        metrics[f"spacepoint/x-resolution-{stage}"] = xyz[0]
        metrics[f"spacepoint/y-resolution-{stage}"] = xyz[1]
        metrics[f"spacepoint/z-resolution-{stage}"] = xyz[2]
        metrics[f"spacepoint/resolution-{stage}"] = jnp.sqrt(jnp.sum(jnp.square(xyz)))
    if stage == "train":
        metrics["temperature/spacepoint"] = temp

    # TODO(synk): PyG Batch._slice_dict / _inc_dict bookkeeping has no array-compute
    # equivalent; only the numerical forward pass is implemented.
    return loss, metrics, x_position


# ---------------------------------------------------------------------------
# Pure-JAX reference for correctness check
# ---------------------------------------------------------------------------
def _reference(params, x, plane, y_semantic, y_position):
    P = params["w"].shape[0]
    x_pos = jnp.zeros((x.shape[0], 3), jnp.float32)
    for p in range(P):
        yp = x @ params["w"][p] + params["b"][p]
        x_pos = jnp.where(plane == p, yp, x_pos)
    mask = y_semantic != -1
    xm = x_pos[mask]
    ym = y_position[mask]
    lc = jnp.mean(jnp.log(jnp.cosh(xm - ym + 1e-12)))
    temp = params["temp"]
    loss = jnp.exp(-temp) * lc + temp
    xyz = jnp.mean(jnp.abs(xm - ym), axis=0)
    res = jnp.sqrt(jnp.sum(jnp.square(xyz)))
    return loss, xyz, res, x_pos


if __name__ == "__main__":
    key = jax.random.PRNGKey(0)
    N, F, P = 96, 32, 3          # hits, hit_features, num_planes
    k1, k2, k3, k4, k5, k6 = jax.random.split(key, 6)

    x = jax.random.normal(k1, (N, F), jnp.float32)
    plane = jax.random.randint(k2, (N, 1), 0, P, jnp.int32)
    y_position = jax.random.normal(k3, (N, 3), jnp.float32)
    y_semantic = jax.random.randint(k4, (N,), -1, 5, jnp.int32)

    params = {
        "temp": jnp.float32(6.0),
        "w": 0.1 * jax.random.normal(k5, (P, F, 3), jnp.float32),
        "b": 0.1 * jax.random.normal(k6, (P, 1, 3), jnp.float32),
    }

    loss, metrics, x_position = spacepoint_decoder_forward(
        params, x, plane, y_semantic, y_position, stage="train")
    jax.block_until_ready((loss, metrics, x_position))

    # correctness check vs. pure-JAX reference
    ref_loss, ref_xyz, ref_res, ref_xpos = _reference(
        params, x, plane, y_semantic, y_position)
    assert jnp.allclose(x_position, ref_xpos, atol=1e-4, rtol=1e-4)
    assert jnp.allclose(loss, ref_loss, atol=1e-4, rtol=1e-4)
    assert jnp.allclose(metrics["spacepoint/x-resolution-train"], ref_xyz[0], atol=1e-4)
    assert jnp.allclose(metrics["spacepoint/y-resolution-train"], ref_xyz[1], atol=1e-4)
    assert jnp.allclose(metrics["spacepoint/z-resolution-train"], ref_xyz[2], atol=1e-4)
    assert jnp.allclose(metrics["spacepoint/resolution-train"], ref_res, atol=1e-4)

    print("KERNEL_OK")
</pallas_src>

<mosaic_0001>
module attributes {stable_mosaic.version = 11 : i64} {
  func.func @_fused_kernel(%arg0: i32, %arg1: i32, %arg2: memref<256x32xf32, #tpu.memory_space<vmem>>, %arg3: memref<256x8xf32, #tpu.memory_space<vmem>>, %arg4: memref<32x9xf32, #tpu.memory_space<vmem>>, %arg5: memref<1x9xf32, #tpu.memory_space<vmem>>, %arg6: memref<1x9xf32, #tpu.memory_space<vmem>>, %arg7: memref<9x8xf32, #tpu.memory_space<vmem>>, %arg8: memref<3x256xf32, #tpu.memory_space<vmem>>, %arg9: memref<1x1x3xf32, #tpu.memory_space<vmem>>, %arg10: memref<1x1x3xf32, #tpu.memory_space<vmem>>, %arg11: memref<1x1x1xf32, #tpu.memory_space<vmem>>) attributes {dimension_semantics = [#tpu.dimension_semantics<arbitrary>, #tpu.dimension_semantics<arbitrary>], iteration_bounds = array<i64: 1, 1>, scalar_prefetch = 0 : i64, scratch_operands = 0 : i64, tpu.core_type = #tpu.core_type<tc>, window_params = [{transform_indices = @transform_0, window_bounds = array<i64: 256, 32>}, {transform_indices = @transform_1, window_bounds = array<i64: 256, 8>}, {pipeline_mode = #tpu.pipeline_mode<synchronous>, transform_indices = @transform_2, window_bounds = array<i64: 32, 9>}, {pipeline_mode = #tpu.pipeline_mode<synchronous>, transform_indices = @transform_3, window_bounds = array<i64: 1, 9>}, {pipeline_mode = #tpu.pipeline_mode<synchronous>, transform_indices = @transform_4, window_bounds = array<i64: 1, 9>}, {pipeline_mode = #tpu.pipeline_mode<synchronous>, transform_indices = @transform_5, window_bounds = array<i64: 9, 8>}, {transform_indices = @transform_6, window_bounds = array<i64: 3, 256>}, {transform_indices = @transform_7, window_bounds = array<i64: 1, 1, 3>}, {transform_indices = @transform_8, window_bounds = array<i64: 1, 1, 3>}, {transform_indices = @transform_9, window_bounds = array<i64: 1, 1, 1>}]} {
    %c0_i32 = arith.constant 0 : i32
    %0 = arith.cmpi eq, %arg1, %c0_i32 : i32
    %1 = arith.extui %0 : i1 to i32
    %c0_i32_0 = arith.constant 0 : i32
    %2 = arith.cmpi ne, %1, %c0_i32_0 : i32
    scf.if %2 {
      %cst_40 = arith.constant 0.000000e+00 : f32
      %59 = vector.broadcast %cst_40 : f32 to vector<1x1x3xf32>
      %c0_41 = arith.constant 0 : index
      %c0_42 = arith.constant 0 : index
      %c0_43 = arith.constant 0 : index
      %60 = vector.load %arg9[%c0_41, %c0_42, %c0_43] : memref<1x1x3xf32, #tpu.memory_space<vmem>>, vector<1x1x3xf32>
      tpu.vector_store %arg9[%c0_41, %c0_42, %c0_43], %59 {strides = array<i32>} : memref<1x1x3xf32, #tpu.memory_space<vmem>>, vector<1x1x3xf32>,
      %cst_44 = arith.constant 0.000000e+00 : f32
      %61 = vector.broadcast %cst_44 : f32 to vector<1x1x3xf32>
      %c0_45 = arith.constant 0 : index
      %c0_46 = arith.constant 0 : index
      %c0_47 = arith.constant 0 : index
      %62 = vector.load %arg10[%c0_45, %c0_46, %c0_47] : memref<1x1x3xf32, #tpu.memory_space<vmem>>, vector<1x1x3xf32>
      tpu.vector_store %arg10[%c0_45, %c0_46, %c0_47], %61 {strides = array<i32>} : memref<1x1x3xf32, #tpu.memory_space<vmem>>, vector<1x1x3xf32>,
      %cst_48 = arith.constant 0.000000e+00 : f32
      %63 = vector.broadcast %cst_48 : f32 to vector<1x1x1xf32>
      %c0_49 = arith.constant 0 : index
      %c0_50 = arith.constant 0 : index
      %c0_51 = arith.constant 0 : index
      %64 = vector.load %arg11[%c0_49, %c0_50, %c0_51] : memref<1x1x1xf32, #tpu.memory_space<vmem>>, vector<1x1x1xf32>
      tpu.vector_store %arg11[%c0_49, %c0_50, %c0_51], %63 {strides = array<i32>} : memref<1x1x1xf32, #tpu.memory_space<vmem>>, vector<1x1x1xf32>,
    } else {
    }
    %c0 = arith.constant 0 : index
    %c0_1 = arith.constant 0 : index
    %3 = vector.load %arg2[%c0, %c0_1] : memref<256x32xf32, #tpu.memory_space<vmem>>, vector<256x32xf32>
    %c0_2 = arith.constant 0 : index
    %c0_3 = arith.constant 0 : index
    %4 = vector.load %arg3[%c0_2, %c0_3] : memref<256x8xf32, #tpu.memory_space<vmem>>, vector<256x8xf32>
    %5 = vector.extract_strided_slice %4 {offsets = [0, 0], sizes = [256, 3], strides = [1, 1]} : vector<256x8xf32> to vector<256x3xf32>
    %6 = vector.extract_strided_slice %4 {offsets = [0, 3], sizes = [256, 1], strides = [1, 1]} : vector<256x8xf32> to vector<256x1xf32>
    %7 = vector.extract_strided_slice %4 {offsets = [0, 4], sizes = [256, 1], strides = [1, 1]} : vector<256x8xf32> to vector<256x1xf32>
    %c0_4 = arith.constant 0 : index
    %c0_5 = arith.constant 0 : index
    %8 = vector.load %arg4[%c0_4, %c0_5] : memref<32x9xf32, #tpu.memory_space<vmem>>, vector<32x9xf32>
    %cst = arith.constant dense<0.000000e+00> : vector<256x9xf32>
    %9 = tpu.matmul %3, %8, %cst {dimension_numbers = #tpu.dot_dimension_numbers<[1], [0], [0], [1], [0, 0, 1, 1], [], []>} : vector<256x32xf32>, vector<32x9xf32>, vector<256x9xf32> -> vector<256x9xf32>
    %c0_6 = arith.constant 0 : index
    %c0_7 = arith.constant 0 : index
    %10 = vector.load %arg5[%c0_6, %c0_7] : memref<1x9xf32, #tpu.memory_space<vmem>>, vector<1x9xf32>
    %11 = vector.broadcast %10 : vector<1x9xf32> to vector<256x9xf32>
    %12 = arith.addf %9, %11 : vector<256x9xf32>
    %c0_8 = arith.constant 0 : index
    %c0_9 = arith.constant 0 : index
    %13 = vector.load %arg6[%c0_8, %c0_9] : memref<1x9xf32, #tpu.memory_space<vmem>>, vector<1x9xf32>
    %14 = vector.broadcast %13 : vector<1x9xf32> to vector<256x9xf32>
    %15 = vector.broadcast %6 : vector<256x1xf32> to vector<256x9xf32>
    %16 = arith.cmpf oeq, %14, %15 : vector<256x9xf32>
    %cst_10 = arith.constant 0.000000e+00 : f32
    %17 = vector.broadcast %cst_10 : f32 to vector<256x9xf32>
    %18 = arith.select %16, %12, %17 : vector<256x9xi1>, vector<256x9xf32>
    %c0_11 = arith.constant 0 : index
    %c0_12 = arith.constant 0 : index
    %19 = vector.load %arg7[%c0_11, %c0_12] : memref<9x8xf32, #tpu.memory_space<vmem>>, vector<9x8xf32>
    %cst_13 = arith.constant dense<0.000000e+00> : vector<256x8xf32>
    %20 = tpu.matmul %18, %19, %cst_13 {dimension_numbers = #tpu.dot_dimension_numbers<[1], [0], [0], [1], [0, 0, 1, 1], [], []>} : vector<256x9xf32>, vector<9x8xf32>, vector<256x8xf32> -> vector<256x8xf32>
    %21 = tpu.transpose %20, [1, 0] : vector<256x8xf32> -> vector<8x256xf32>
    %22 = vector.extract_strided_slice %21 {offsets = [0, 0], sizes = [3, 256], strides = [1, 1]} : vector<8x256xf32> to vector<3x256xf32>
    %c0_14 = arith.constant 0 : index
    %c0_15 = arith.constant 0 : index
    %23 = vector.load %arg8[%c0_14, %c0_15] : memref<3x256xf32, #tpu.memory_space<vmem>>, vector<3x256xf32>
    tpu.vector_store %arg8[%c0_14, %c0_15], %22 {strides = array<i32>} : memref<3x256xf32, #tpu.memory_space<vmem>>, vector<3x256xf32>,
    %24 = vector.extract_strided_slice %20 {offsets = [0, 0], sizes = [256, 3], strides = [1, 1]} : vector<256x8xf32> to vector<256x3xf32>
    %25 = arith.subf %24, %5 : vector<256x3xf32>
    %26 = math.absf %25 : vector<256x3xf32>
    %cst_16 = arith.constant 9.99999996E-13 : f32
    %27 = vector.broadcast %cst_16 : f32 to vector<256x3xf32>
    %28 = arith.addf %25, %27 : vector<256x3xf32>
    %29 = math.absf %28 : vector<256x3xf32>
    %cst_17 = arith.constant -2.000000e+00 : f32
    %30 = vector.broadcast %cst_17 : f32 to vector<256x3xf32>
    %31 = arith.mulf %30, %29 : vector<256x3xf32>
    %32 = math.exp %31 : vector<256x3xf32>
    %33 = math.log1p %32 : vector<256x3xf32>
    %34 = arith.addf %29, %33 : vector<256x3xf32>
    %cst_18 = arith.constant 0.693147182 : f32
    %35 = vector.broadcast %cst_18 : f32 to vector<256x3xf32>
    %36 = arith.subf %34, %35 : vector<256x3xf32>
    %c0_19 = arith.constant 0 : index
    %c0_20 = arith.constant 0 : index
    %c0_21 = arith.constant 0 : index
    %37 = vector.load %arg9[%c0_19, %c0_20, %c0_21] : memref<1x1x3xf32, #tpu.memory_space<vmem>>, vector<1x1x3xf32>
    %38 = vector.broadcast %7 : vector<256x1xf32> to vector<256x3xf32>
    %39 = arith.mulf %36, %38 : vector<256x3xf32>
    %cst_22 = arith.constant dense<0.000000e+00> : vector<3xf32>
    %40 = vector.multi_reduction <add>, %39, %cst_22 [0] : vector<256x3xf32> to vector<3xf32>
    %41 = vector.shape_cast %40 : vector<3xf32> to vector<1x3xf32>
    %42 = vector.shape_cast %41 : vector<1x3xf32> to vector<1x1x3xf32>
    %43 = arith.addf %37, %42 : vector<1x1x3xf32>
    %c0_23 = arith.constant 0 : index
    %c0_24 = arith.constant 0 : index
    %c0_25 = arith.constant 0 : index
    %44 = vector.load %arg9[%c0_23, %c0_24, %c0_25] : memref<1x1x3xf32, #tpu.memory_space<vmem>>, vector<1x1x3xf32>
    tpu.vector_store %arg9[%c0_23, %c0_24, %c0_25], %43 {strides = array<i32>} : memref<1x1x3xf32, #tpu.memory_space<vmem>>, vector<1x1x3xf32>,
    %c0_26 = arith.constant 0 : index
    %c0_27 = arith.constant 0 : index
    %c0_28 = arith.constant 0 : index
    %45 = vector.load %arg10[%c0_26, %c0_27, %c0_28] : memref<1x1x3xf32, #tpu.memory_space<vmem>>, vector<1x1x3xf32>
    %46 = vector.broadcast %7 : vector<256x1xf32> to vector<256x3xf32>
    %47 = arith.mulf %26, %46 : vector<256x3xf32>
    %cst_29 = arith.constant dense<0.000000e+00> : vector<3xf32>
    %48 = vector.multi_reduction <add>, %47, %cst_29 [0] : vector<256x3xf32> to vector<3xf32>
    %49 = vector.shape_cast %48 : vector<3xf32> to vector<1x3xf32>
    %50 = vector.shape_cast %49 : vector<1x3xf32> to vector<1x1x3xf32>
    %51 = arith.addf %45, %50 : vector<1x1x3xf32>
    %c0_30 = arith.constant 0 : index
    %c0_31 = arith.constant 0 : index
    %c0_32 = arith.constant 0 : index
    %52 = vector.load %arg10[%c0_30, %c0_31, %c0_32] : memref<1x1x3xf32, #tpu.memory_space<vmem>>, vector<1x1x3xf32>
    tpu.vector_store %arg10[%c0_30, %c0_31, %c0_32], %51 {strides = array<i32>} : memref<1x1x3xf32, #tpu.memory_space<vmem>>, vector<1x1x3xf32>,
    %c0_33 = arith.constant 0 : index
    %c0_34 = arith.constant 0 : index
    %c0_35 = arith.constant 0 : index
    %53 = vector.load %arg11[%c0_33, %c0_34, %c0_35] : memref<1x1x1xf32, #tpu.memory_space<vmem>>, vector<1x1x1xf32>
    %cst_36 = arith.constant dense<0.000000e+00> : vector<1xf32>
    %54 = vector.multi_reduction <add>, %7, %cst_36 [0] : vector<256x1xf32> to vector<1xf32>
    %55 = vector.shape_cast %54 : vector<1xf32> to vector<1x1xf32>
    %56 = vector.shape_cast %55 : vector<1x1xf32> to vector<1x1x1xf32>
    %57 = arith.addf %53, %56 : vector<1x1x1xf32>
    %c0_37 = arith.constant 0 : index
    %c0_38 = arith.constant 0 : index
    %c0_39 = arith.constant 0 : index
    %58 = vector.load %arg11[%c0_37, %c0_38, %c0_39] : memref<1x1x1xf32, #tpu.memory_space<vmem>>, vector<1x1x1xf32>
    tpu.vector_store %arg11[%c0_37, %c0_38, %c0_39], %57 {strides = array<i32>} : memref<1x1x1xf32, #tpu.memory_space<vmem>>, vector<1x1x1xf32>,
    return
  }
  func.func @transform_0(%arg0: i32, %arg1: i32) -> (i32, i32) {
    %c1_i32 = arith.constant 1 : i32
    %0 = arith.muli %arg0, %c1_i32 : i32
    %1 = arith.addi %0, %arg1 : i32
    %c0_i32 = arith.constant 0 : i32
    %c0_i32_0 = arith.constant 0 : i32
    return %1, %c0_i32 : i32, i32
  }
  func.func @transform_1(%arg0: i32, %arg1: i32) -> (i32, i32) {
    %c1_i32 = arith.constant 1 : i32
    %0 = arith.muli %arg0, %c1_i32 : i32
    %1 = arith.addi %0, %arg1 : i32
    %c0_i32 = arith.constant 0 : i32
    %c0_i32_0 = arith.constant 0 : i32
    return %1, %c0_i32 : i32, i32
  }
  func.func @transform_2(%arg0: i32, %arg1: i32) -> (i32, i32) {
    %c0_i32 = arith.constant 0 : i32
    %c0_i32_0 = arith.constant 0 : i32
    %c0_i32_1 = arith.constant 0 : i32
    return %c0_i32, %c0_i32_0 : i32, i32
  }
  func.func @transform_3(%arg0: i32, %arg1: i32) -> (i32, i32) {
    %c0_i32 = arith.constant 0 : i32
    %c0_i32_0 = arith.constant 0 : i32
    %c0_i32_1 = arith.constant 0 : i32
    return %c0_i32, %c0_i32_0 : i32, i32
  }
  func.func @transform_4(%arg0: i32, %arg1: i32) -> (i32, i32) {
    %c0_i32 = arith.constant 0 : i32
    %c0_i32_0 = arith.constant 0 : i32
    %c0_i32_1 = arith.constant 0 : i32
    return %c0_i32, %c0_i32_0 : i32, i32
  }
  func.func @transform_5(%arg0: i32, %arg1: i32) -> (i32, i32) {
    %c0_i32 = arith.constant 0 : i32
    %c0_i32_0 = arith.constant 0 : i32
    %c0_i32_1 = arith.constant 0 : i32
    return %c0_i32, %c0_i32_0 : i32, i32
  }
  func.func @transform_6(%arg0: i32, %arg1: i32) -> (i32, i32) {
    %c1_i32 = arith.constant 1 : i32
    %0 = arith.muli %arg0, %c1_i32 : i32
    %1 = arith.addi %0, %arg1 : i32
    %c0_i32 = arith.constant 0 : i32
    %c0_i32_0 = arith.constant 0 : i32
    return %c0_i32, %1 : i32, i32
  }
  func.func @transform_7(%arg0: i32, %arg1: i32) -> (i32, i32, i32) {
    %c0_i32 = arith.constant 0 : i32
    %c0_i32_0 = arith.constant 0 : i32
    %c0_i32_1 = arith.constant 0 : i32
    return %arg0, %c0_i32, %c0_i32_0 : i32, i32, i32
  }
  func.func @transform_8(%arg0: i32, %arg1: i32) -> (i32, i32, i32) {
    %c0_i32 = arith.constant 0 : i32
    %c0_i32_0 = arith.constant 0 : i32
    %c0_i32_1 = arith.constant 0 : i32
    return %arg0, %c0_i32, %c0_i32_0 : i32, i32, i32
  }
  func.func @transform_9(%arg0: i32, %arg1: i32) -> (i32, i32, i32) {
    %c0_i32 = arith.constant 0 : i32
    %c0_i32_0 = arith.constant 0 : i32
    %c0_i32_1 = arith.constant 0 : i32
    return %arg0, %c0_i32, %c0_i32_0 : i32, i32, i32
  }
}

</mosaic_0001>

<llo_original>
// kernel: tpu_custom_call.1
$region0: #{tpu_custom_call.1}
  #allocation0 [shape = 'u32[]', space=smem, size = 0x4, offset = 0x4, fixed_abs, tag = 'smem constant byte address 0x4 - core index']
  #allocation1 [shape = 'u32[144,128]{1,0:T(1,128)}', space=vmem, size = 0x12000, scoped, tag = 'internal scratch']
  %s0 = inlined_call_operand.vmem [shape: f32[256,32], index: 0, kind: input, shape index: {}]
  %s1 = inlined_call_operand.vmem [shape: f32[256,8], index: 1, kind: input, shape index: {}]
  %s2 = inlined_call_operand.vmem [shape: f32[32,9], index: 2, kind: input, shape index: {}]
  %s3 = inlined_call_operand.vmem [shape: f32[1,9], index: 3, kind: input, shape index: {}]
  %s4 = inlined_call_operand.vmem [shape: f32[1,9], index: 4, kind: input, shape index: {}]
  %s5 = inlined_call_operand.vmem [shape: f32[9,8], index: 5, kind: input, shape index: {}]
  %s6 = inlined_call_operand.hbm [shape: f32[3,256], index: 6, kind: output, shape index: {0}]
  %s7 = inlined_call_operand.hbm [shape: f32[1,1,3], index: 7, kind: output, shape index: {1}]
  %s8 = inlined_call_operand.hbm [shape: f32[1,1,3], index: 8, kind: output, shape index: {2}]
  %s9 = inlined_call_operand.hbm [shape: f32[1,1,1], index: 9, kind: output, shape index: {3}]
  %10 = xla_tuple %s6, %s7, %s8, %s9
  %s11 = sld [smem:[#allocation0]]
  $region62: #{tpu_custom_call.1} parent=0
    _
  %s13 = ssub.s32 1, %s11
  %s14 = scalar_select 0, %s13, %s11
  $region1: #{tpu_custom_call.1} parent=0
    #allocation2 [shape = 'u8[4096]{0}', space=vmem, size = 0x1000, scoped, tag = 'output window, operand 0, single buffered']
    #allocation3 [shape = 's32[1]{0}', space=sflag, size = 0x4, scoped, tag = 'scoped memory for tpu_custom_call.1']
    #allocation4 [shape = 'u8[512]{0}', space=vmem, size = 0x400, scoped, tag = 'output window, operand 1, single buffered']
    #allocation5 [shape = 's32[1]{0}', space=sflag, size = 0x4, scoped, tag = 'scoped memory for tpu_custom_call.1']
    #allocation6 [shape = 'u8[512]{0}', space=vmem, size = 0x400, scoped, tag = 'output window, operand 2, single buffered']
    #allocation7 [shape = 'u8[512]{0}', space=vmem, size = 0x400, scoped, tag = 'output window, operand 3, single buffered']
    #allocation8 [shape = 's32[1]{0}', space=sflag, size = 0x4, scoped, tag = 'scoped memory for tpu_custom_call.1']
    %15 = vsyncpa [#allocation3], 0
    %16 = vsyncpa [#allocation5], 0
    %17 = vsyncpa [#allocation8], 0
    // Predicated region
    $region2: #{tpu_custom_call.1} parent=1 // pred_check
      _
    $region3: #{tpu_custom_call.1} parent=1 // pred_check_branch
      %19 = sbr.rel (0) target = $region5
    $region4: #{tpu_custom_call.1} parent=1 // pred_region
      %s20 = sadd.s32 0, 0
      %s21 = smul.u32 32, %s20
      %p22 = scmp.lt.s32.totalorder %s21, 31
      %s23 = scalar_select %p22, %s21, 31
      %s24 = smul.addr %s23, 8
      %s25 = scalar_lea.vmem %s0, %s24
      %s26 = sadd.s32 0, 0
      %s27 = smul.u32 32, %s26
    $region5: #{tpu_custom_call.1} parent=1 // pred_fallthru
      _
    // Predicated region
    $region6: #{tpu_custom_call.1} parent=1 // pred_check
      _
    $region7: #{tpu_custom_call.1} parent=1 // pred_check_branch
      %29 = sbr.rel (0) target = $region9
    $region8: #{tpu_custom_call.1} parent=1 // pred_region
      %s30 = sadd.s32 0, 0
      %s31 = smul.u32 32, %s30
      %p32 = scmp.lt.s32.totalorder %s31, 31
      %s33 = scalar_select %p32, %s31, 31
      %s34 = smul.addr %s33, 8
      %s35 = scalar_lea.vmem %s1, %s34
      %s36 = sadd.s32 0, 0
      %s37 = smul.u32 32, %s36
    $region9: #{tpu_custom_call.1} parent=1 // pred_fallthru
      _
    // Predicated region
    $region10: #{tpu_custom_call.1} parent=1 // pred_check
      _
    $region11: #{tpu_custom_call.1} parent=1 // pred_check_branch
      %39 = sbr.rel (0) target = $region13
    $region12: #{tpu_custom_call.1} parent=1 // pred_region
      _
    $region13: #{tpu_custom_call.1} parent=1 // pred_fallthru
      _
    // Predicated region
    $region14: #{tpu_custom_call.1} parent=1 // pred_check
      _
    $region15: #{tpu_custom_call.1} parent=1 // pred_check_branch
      %41 = sbr.rel (0) target = $region17
    $region16: #{tpu_custom_call.1} parent=1 // pred_region
      _
    $region17: #{tpu_custom_call.1} parent=1 // pred_fallthru
      _
    // Predicated region
    $region18: #{tpu_custom_call.1} parent=1 // pred_check
      _
    $region19: #{tpu_custom_call.1} parent=1 // pred_check_branch
      %43 = sbr.rel (0) target = $region21
    $region20: #{tpu_custom_call.1} parent=1 // pred_region
      _
    $region21: #{tpu_custom_call.1} parent=1 // pred_fallthru
      _
    // Predicated region
    $region22: #{tpu_custom_call.1} parent=1 // pred_check
      _
    $region23: #{tpu_custom_call.1} parent=1 // pred_check_branch
      %45 = sbr.rel (0) target = $region25
    $region24: #{tpu_custom_call.1} parent=1 // pred_region
      _
    $region25: #{tpu_custom_call.1} parent=1 // pred_fallthru
      _
    %s46 = sadd.s32 0, 0
    %s47 = smul.u32 32, %s46
    %p48 = scmp.lt.s32.totalorder %s47, 31
    %s49 = scalar_select %p48, %s47, 31
    %s50 = smul.addr %s49, 8
    %s51 = scalar_lea.vmem %s0, %s50
    %s52 = sadd.s32 0, 0
    %s53 = smul.u32 32, %s52
    %p54 = scmp.lt.s32.totalorder %s53, 31
    %s55 = scalar_select %p54, %s53, 31
    %s56 = smul.addr %s55, 8
    %s57 = scalar_lea.vmem %s1, %s56
    %s58 = sadd.s32 0, 0
    %s59 = smul.u32 32, %s58
    %p60 = scmp.lt.s32.totalorder %s59, 31
    %s61 = scalar_select %p60, %s59, 31
    %s62 = smul.addr %s61, 8
    %s63 = scalar_lea.vmem %s0, %s62
    %s64 = sadd.s32 0, 0
    %s65 = smul.u32 32, %s64
    %s66 = sadd.s32 0, 0
    %s67 = smul.u32 32, %s66
    %p68 = scmp.lt.s32.totalorder %s67, 31
    %s69 = scalar_select %p68, %s67, 31
    %s70 = smul.addr %s69, 8
    %s71 = scalar_lea.vmem %s1, %s70
    %s72 = sadd.s32 0, 0
    %s73 = smul.u32 32, %s72
    %s74 = sadd.s32 0, 0
    %s75 = smul.u32 2, %s74
    %p76 = scmp.eq.s32.totalorder 0, 0
    // Predicated region
    $region26: #{tpu_custom_call.1} parent=1 // pred_check
      %p77 = pneg %p76
    $region27: #{tpu_custom_call.1} parent=1 // pred_check_branch
      %79 = sbr.rel (%p77) target = $region29
    $region28: #{tpu_custom_call.1} parent=1 // pred_region
      %vm80 = vcmask 16384
      %81 = vst.msk [vmem:[#allocation4] sm:$0x1] %vm80, 0.0
      %82 = vst.msk [vmem:[#allocation6] sm:$0x1] %vm80, 0.0
      %vm83 = vcmask 0
      %84 = vst.msk [vmem:[#allocation7] sm:$0x1] %vm83, 0.0
    $region29: #{tpu_custom_call.1} parent=1 // pred_fallthru
      _
    %v85 = vld [vmem:[%s63] sm:$0xff]
    %v86 = vld [vmem:[%s63 + $0x8] sm:$0xff]
    %v87 = vld [vmem:[%s63 + $0x10] sm:$0xff]
    %v88 = vld [vmem:[%s63 + $0x18] sm:$0xff]
    %v89 = vld [vmem:[%s63 + $0x20] sm:$0xff]
    %v90 = vld [vmem:[%s63 + $0x28] sm:$0xff]
    %v91 = vld [vmem:[%s63 + $0x30] sm:$0xff]
    %v92 = vld [vmem:[%s63 + $0x38] sm:$0xff]
    %v93 = vld [vmem:[%s63 + $0x40] sm:$0xff]
    %v94 = vld [vmem:[%s63 + $0x48] sm:$0xff]
    %v95 = vld [vmem:[%s63 + $0x50] sm:$0xff]
    %v96 = vld [vmem:[%s63 + $0x58] sm:$0xff]
    %v97 = vld [vmem:[%s63 + $0x60] sm:$0xff]
    %v98 = vld [vmem:[%s63 + $0x68] sm:$0xff]
    %v99 = vld [vmem:[%s63 + $0x70] sm:$0xff]
    %v100 = vld [vmem:[%s63 + $0x78] sm:$0xff]
    %v101 = vld [vmem:[%s63 + $0x80] sm:$0xff]
    %v102 = vld [vmem:[%s63 + $0x88] sm:$0xff]
    %v103 = vld [vmem:[%s63 + $0x90] sm:$0xff]
    %v104 = vld [vmem:[%s63 + $0x98] sm:$0xff]
    %v105 = vld [vmem:[%s63 + $0xa0] sm:$0xff]
    %v106 = vld [vmem:[%s63 + $0xa8] sm:$0xff]
    %v107 = vld [vmem:[%s63 + $0xb0] sm:$0xff]
    %v108 = vld [vmem:[%s63 + $0xb8] sm:$0xff]
    %v109 = vld [vmem:[%s63 + $0xc0] sm:$0xff]
    %v110 = vld [vmem:[%s63 + $0xc8] sm:$0xff]
    %v111 = vld [vmem:[%s63 + $0xd0] sm:$0xff]
    %v112 = vld [vmem:[%s63 + $0xd8] sm:$0xff]
    %v113 = vld [vmem:[%s63 + $0xe0] sm:$0xff]
    %v114 = vld [vmem:[%s63 + $0xe8] sm:$0xff]
    %v115 = vld [vmem:[%s63 + $0xf0] sm:$0xff]
    %v116 = vld [vmem:[%s63 + $0xf8] sm:$0xff]
    %v117 = vld [vmem:[%s71] sm:$0xff]
    %v118 = vld [vmem:[%s71 + $0x8] sm:$0xff]
    %v119 = vld [vmem:[%s71 + $0x10] sm:$0xff]
    %v120 = vld [vmem:[%s71 + $0x18] sm:$0xff]
    %v121 = vld [vmem:[%s71 + $0x20] sm:$0xff]
    %v122 = vld [vmem:[%s71 + $0x28] sm:$0xff]
    %v123 = vld [vmem:[%s71 + $0x30] sm:$0xff]
    %v124 = vld [vmem:[%s71 + $0x38] sm:$0xff]
    %v125 = vld [vmem:[%s71 + $0x40] sm:$0xff]
    %v126 = vld [vmem:[%s71 + $0x48] sm:$0xff]
    %v127 = vld [vmem:[%s71 + $0x50] sm:$0xff]
    %v128 = vld [vmem:[%s71 + $0x58] sm:$0xff]
    %v129 = vld [vmem:[%s71 + $0x60] sm:$0xff]
    %v130 = vld [vmem:[%s71 + $0x68] sm:$0xff]
    %v131 = vld [vmem:[%s71 + $0x70] sm:$0xff]
    %v132 = vld [vmem:[%s71 + $0x78] sm:$0xff]
    %v133 = vld [vmem:[%s71 + $0x80] sm:$0xff]
    %v134 = vld [vmem:[%s71 + $0x88] sm:$0xff]
    %v135 = vld [vmem:[%s71 + $0x90] sm:$0xff]
    %v136 = vld [vmem:[%s71 + $0x98] sm:$0xff]
    %v137 = vld [vmem:[%s71 + $0xa0] sm:$0xff]
    %v138 = vld [vmem:[%s71 + $0xa8] sm:$0xff]
    %v139 = vld [vmem:[%s71 + $0xb0] sm:$0xff]
    %v140 = vld [vmem:[%s71 + $0xb8] sm:$0xff]
    %v141 = vld [vmem:[%s71 + $0xc0] sm:$0xff]
    %v142 = vld [vmem:[%s71 + $0xc8] sm:$0xff]
    %v143 = vld [vmem:[%s71 + $0xd0] sm:$0xff]
    %v144 = vld [vmem:[%s71 + $0xd8] sm:$0xff]
    %v145 = vld [vmem:[%s71 + $0xe0] sm:$0xff]
    %v146 = vld [vmem:[%s71 + $0xe8] sm:$0xff]
    %v147 = vld [vmem:[%s71 + $0xf0] sm:$0xff]
    %v148 = vld [vmem:[%s71 + $0xf8] sm:$0xff]
    %v149 = vld [vmem:[%s2] sm:$0xff]
    %v150 = vld [vmem:[%s2 + $0x8] sm:$0xff]
    %v151 = vld [vmem:[%s2 + $0x10] sm:$0xff]
    %v152 = vld [vmem:[%s2 + $0x18] sm:$0xff]
    %v153 = vld [vmem:[%s3] sm:$0x1]
    %v155 = vlaneseq
    %v156 = vshrl.u32 %v155, 7
    %v157 = vsub.s32 0, %v156
    %v158 = vrot.slane %v153, %v157
    %vm160 = vcmask 261120
    %v162 = vsel %vm160, %v85, 0
    %v165 = vsel %vm160, %v86, 0
    %v168 = vsel %vm160, %v87, 0
    %v171 = vsel %vm160, %v88, 0
    %v174 = vsel %vm160, %v89, 0
    %v177 = vsel %vm160, %v90, 0
    %v180 = vsel %vm160, %v91, 0
    %v183 = vsel %vm160, %v92, 0
    %v186 = vsel %vm160, %v93, 0
    %v189 = vsel %vm160, %v94, 0
    %v192 = vsel %vm160, %v95, 0
    %v195 = vsel %vm160, %v96, 0
    %v198 = vsel %vm160, %v97, 0
    %v201 = vsel %vm160, %v98, 0
    %v204 = vsel %vm160, %v99, 0
    %v207 = vsel %vm160, %v100, 0
    %v210 = vsel %vm160, %v101, 0
    %v213 = vsel %vm160, %v102, 0
    %v216 = vsel %vm160, %v103, 0
    %v219 = vsel %vm160, %v104, 0
    %v222 = vsel %vm160, %v105, 0
    %v225 = vsel %vm160, %v106, 0
    %v228 = vsel %vm160, %v107, 0
    %v231 = vsel %vm160, %v108, 0
    %v234 = vsel %vm160, %v109, 0
    %v237 = vsel %vm160, %v110, 0
    %v240 = vsel %vm160, %v111, 0
    %v243 = vsel %vm160, %v112, 0
    %v246 = vsel %vm160, %v113, 0
    %v249 = vsel %vm160, %v114, 0
    %v252 = vsel %vm160, %v115, 0
    %v255 = vsel %vm160, %v116, 0
    %257 = vmatprep.subr.mxu0 0.0
    %258 = vmatpush1.msra.mxu0 0.0
    %259 = vmatprep.subr.mxu0 0.0
    %260 = vmatpush1.msra.mxu0 0.0
    %261 = vmatprep.subr.mxu0 0.0
    %262 = vmatpush1.msra.mxu0 0.0
    %263 = vmatprep.subr.mxu0 0.0
    %264 = vmatpush1.msra.mxu0 0.0
    %265 = vmatprep.subr.mxu0 0.0
    %266 = vmatpush1.msra.mxu0 0.0
    %267 = vmatprep.subr.mxu0 0.0
    %268 = vmatpush1.msra.mxu0 0.0
    %269 = vmatprep.subr.mxu0 0.0
    %270 = vmatpush1.msra.mxu0 0.0
    %271 = vmatprep.subr.mxu0 0.0
    %272 = vmatpush1.msra.mxu0 0.0
    %273 = vmatprep.subr.mxu0 0.0
    %274 = vmatpush1.msra.mxu0 0.0
    %275 = vmatprep.subr.mxu0 0.0
    %276 = vmatpush1.msra.mxu0 0.0
    %277 = vmatprep.subr.mxu0 0.0
    %278 = vmatpush1.msra.mxu0 0.0
    %279 = vmatprep.subr.mxu0 0.0
    %280 = vmatpush1.msra.mxu0 0.0
    %281 = vmatprep.subr.mxu0 0.0
    %282 = vmatpush1.msra.mxu0 %v152
    %283 = vmatprep.subr.mxu0 0.0
    %284 = vmatpush1.msra.mxu0 %v151
    %285 = vmatprep.subr.mxu0 0.0
    %286 = vmatpush1.msra.mxu0 %v150
    %287 = vmatprep.subr.mxu0 0.0
    %288 = vmatpush1.msra.mxu0 %v149
    %289 = vmatprep.subr.mxu0 0.0
    %290 = vmatpush2.msra.mxu0 0.0
    %291 = vmatprep.subr.mxu0 0.0
    %292 = vmatpush2.msra.mxu0 0.0
    %293 = vmatprep.subr.mxu0 0.0
    %294 = vmatpush2.msra.mxu0 0.0
    %295 = vmatprep.subr.mxu0 0.0
    %296 = vmatpush2.msra.mxu0 0.0
    %297 = vmatprep.subr.mxu0 0.0
    %298 = vmatpush2.msra.mxu0 0.0
    %299 = vmatprep.subr.mxu0 0.0
    %300 = vmatpush2.msra.mxu0 0.0
    %301 = vmatprep.subr.mxu0 0.0
    %302 = vmatpush2.msra.mxu0 0.0
    %303 = vmatprep.subr.mxu0 0.0
    %304 = vmatpush2.msra.mxu0 0.0
    %305 = vmatprep.subr.mxu0 0.0
    %306 = vmatpush2.msra.mxu0 0.0
    %307 = vmatprep.subr.mxu0 0.0
    %308 = vmatpush2.msra.mxu0 0.0
    %309 = vmatprep.subr.mxu0 0.0
    %310 = vmatpush2.msra.mxu0 0.0
    %311 = vmatprep.subr.mxu0 0.0
    %312 = vmatpush2.msra.mxu0 0.0
    %313 = vmatprep.subr.mxu0 0.0
    %314 = vmatpush2.msra.mxu0 0.0
    %315 = vmatprep.subr.mxu0 0.0
    %316 = vmatpush2.msra.mxu0 0.0
    %317 = vmatprep.subr.mxu0 0.0
    %318 = vmatpush2.msra.mxu0 0.0
    %319 = vmatprep.subr.mxu0 0.0
    %320 = vmatpush2.msra.mxu0 0.0
    %321 = vmatprep.mubr.f32.mxu0 0.0
    %322 = vmatmul.mubr.f32.gmra.mxu0 %v162
    %v323 = vpop.f32.mrf.mxu0
    %v324 = vadd.f32 %v158, %v323
    %v325 = vpop.f32.mrf.mxu0
    %326 = vmatprep.mubr.f32.mxu0 0.0
    %327 = vmatmul.mubr.f32.gmra.mxu0 %v165
    %v328 = vpop.f32.mrf.mxu0
    %v329 = vadd.f32 %v158, %v328
    %v330 = vpop.f32.mrf.mxu0
    %331 = vmatprep.mubr.f32.mxu0 0.0
    %332 = vmatmul.mubr.f32.gmra.mxu0 %v168
    %v333 = vpop.f32.mrf.mxu0
    %v334 = vadd.f32 %v158, %v333
    %v335 = vpop.f32.mrf.mxu0
    %336 = vmatprep.mubr.f32.mxu0 0.0
    %337 = vmatmul.mubr.f32.gmra.mxu0 %v171
    %v338 = vpop.f32.mrf.mxu0
    %v339 = vadd.f32 %v158, %v338
    %v340 = vpop.f32.mrf.mxu0
    %341 = vmatprep.mubr.f32.mxu0 0.0
    %342 = vmatmul.mubr.f32.gmra.mxu0 %v174
    %v343 = vpop.f32.mrf.mxu0
    %v344 = vadd.f32 %v158, %v343
    %v345 = vpop.f32.mrf.mxu0
    %346 = vmatprep.mubr.f32.mxu0 0.0
    %347 = vmatmul.mubr.f32.gmra.mxu0 %v177
    %v348 = vpop.f32.mrf.mxu0
    %v349 = vadd.f32 %v158, %v348
    %v350 = vpop.f32.mrf.mxu0
    %351 = vmatprep.mubr.f32.mxu0 0.0
    %352 = vmatmul.mubr.f32.gmra.mxu0 %v180
    %v353 = vpop.f32.mrf.mxu0
    %v354 = vadd.f32 %v158, %v353
    %v355 = vpop.f32.mrf.mxu0
    %356 = vmatprep.mubr.f32.mxu0 0.0
    %357 = vmatmul.mubr.f32.gmra.mxu0 %v183
    %v358 = vpop.f32.mrf.mxu0
    %v359 = vadd.f32 %v158, %v358
    %v360 = vpop.f32.mrf.mxu0
    %361 = vmatprep.mubr.f32.mxu0 0.0
    %362 = vmatmul.mubr.f32.gmra.mxu0 %v186
    %v363 = vpop.f32.mrf.mxu0
    %v364 = vadd.f32 %v158, %v363
    %v365 = vpop.f32.mrf.mxu0
    %366 = vmatprep.mubr.f32.mxu0 0.0
    %367 = vmatmul.mubr.f32.gmra.mxu0 %v189
    %v368 = vpop.f32.mrf.mxu0
    %v369 = vadd.f32 %v158, %v368
    %v370 = vpop.f32.mrf.mxu0
    %371 = vmatprep.mubr.f32.mxu0 0.0
    %372 = vmatmul.mubr.f32.gmra.mxu0 %v192
    %v373 = vpop.f32.mrf.mxu0
    %v374 = vadd.f32 %v158, %v373
    %v375 = vpop.f32.mrf.mxu0
    %376 = vmatprep.mubr.f32.mxu0 0.0
    %377 = vmatmul.mubr.f32.gmra.mxu0 %v195
    %v378 = vpop.f32.mrf.mxu0
    %v379 = vadd.f32 %v158, %v378
    %v380 = vpop.f32.mrf.mxu0
    %381 = vmatprep.mubr.f32.mxu0 0.0
    %382 = vmatmul.mubr.f32.gmra.mxu0 %v198
    %v383 = vpop.f32.mrf.mxu0
    %v384 = vadd.f32 %v158, %v383
    %v385 = vpop.f32.mrf.mxu0
    %386 = vmatprep.mubr.f32.mxu0 0.0
    %387 = vmatmul.mubr.f32.gmra.mxu0 %v201
    %v388 = vpop.f32.mrf.mxu0
    %v389 = vadd.f32 %v158, %v388
    %v390 = vpop.f32.mrf.mxu0
    %391 = vmatprep.mubr.f32.mxu0 0.0
    %392 = vmatmul.mubr.f32.gmra.mxu0 %v204
    %v393 = vpop.f32.mrf.mxu0
    %v394 = vadd.f32 %v158, %v393
    %v395 = vpop.f32.mrf.mxu0
    %396 = vmatprep.mubr.f32.mxu0 0.0
    %397 = vmatmul.mubr.f32.gmra.mxu0 %v207
    %v398 = vpop.f32.mrf.mxu0
    %v399 = vadd.f32 %v158, %v398
    %v400 = vpop.f32.mrf.mxu0
    %401 = vmatprep.mubr.f32.mxu0 0.0
    %402 = vmatmul.mubr.f32.gmra.mxu0 %v210
    %v403 = vpop.f32.mrf.mxu0
    %v404 = vadd.f32 %v158, %v403
    %v405 = vpop.f32.mrf.mxu0
    %406 = vmatprep.mubr.f32.mxu0 0.0
    %407 = vmatmul.mubr.f32.gmra.mxu0 %v213
    %v408 = vpop.f32.mrf.mxu0
    %v409 = vadd.f32 %v158, %v408
    %v410 = vpop.f32.mrf.mxu0
    %411 = vmatprep.mubr.f32.mxu0 0.0
    %412 = vmatmul.mubr.f32.gmra.mxu0 %v216
    %v413 = vpop.f32.mrf.mxu0
    %v414 = vadd.f32 %v158, %v413
    %v415 = vpop.f32.mrf.mxu0
    %416 = vmatprep.mubr.f32.mxu0 0.0
    %417 = vmatmul.mubr.f32.gmra.mxu0 %v219
    %v418 = vpop.f32.mrf.mxu0
    %v419 = vadd.f32 %v158, %v418
    %v420 = vpop.f32.mrf.mxu0
    %421 = vmatprep.mubr.f32.mxu0 0.0
    %422 = vmatmul.mubr.f32.gmra.mxu0 %v222
    %v423 = vpop.f32.mrf.mxu0
    %v424 = vadd.f32 %v158, %v423
    %v425 = vpop.f32.mrf.mxu0
    %426 = vmatprep.mubr.f32.mxu0 0.0
    %427 = vmatmul.mubr.f32.gmra.mxu0 %v225
    %v428 = vpop.f32.mrf.mxu0
    %v429 = vadd.f32 %v158, %v428
    %v430 = vpop.f32.mrf.mxu0
    %431 = vmatprep.mubr.f32.mxu0 0.0
    %432 = vmatmul.mubr.f32.gmra.mxu0 %v228
    %v433 = vpop.f32.mrf.mxu0
    %v434 = vadd.f32 %v158, %v433
    %v435 = vpop.f32.mrf.mxu0
    %436 = vmatprep.mubr.f32.mxu0 0.0
    %437 = vmatmul.mubr.f32.gmra.mxu0 %v231
    %v438 = vpop.f32.mrf.mxu0
    %v439 = vadd.f32 %v158, %v438
    %v440 = vpop.f32.mrf.mxu0
    %441 = vmatprep.mubr.f32.mxu0 0.0
    %442 = vmatmul.mubr.f32.gmra.mxu0 %v234
    %v443 = vpop.f32.mrf.mxu0
    %v444 = vadd.f32 %v158, %v443
    %v445 = vpop.f32.mrf.mxu0
    %446 = vmatprep.mubr.f32.mxu0 0.0
    %447 = vmatmul.mubr.f32.gmra.mxu0 %v237
    %v448 = vpop.f32.mrf.mxu0
    %v449 = vadd.f32 %v158, %v448
    %v450 = vpop.f32.mrf.mxu0
    %451 = vmatprep.mubr.f32.mxu0 0.0
    %452 = vmatmul.mubr.f32.gmra.mxu0 %v240
    %v453 = vpop.f32.mrf.mxu0
    %v454 = vadd.f32 %v158, %v453
    %v455 = vpop.f32.mrf.mxu0
    %456 = vmatprep.mubr.f32.mxu0 0.0
    %457 = vmatmul.mubr.f32.gmra.mxu0 %v243
    %v458 = vpop.f32.mrf.mxu0
    %v459 = vadd.f32 %v158, %v458
    %v460 = vpop.f32.mrf.mxu0
    %461 = vmatprep.mubr.f32.mxu0 0.0
    %462 = vmatmul.mubr.f32.gmra.mxu0 %v246
    %v463 = vpop.f32.mrf.mxu0
    %v464 = vadd.f32 %v158, %v463
    %v465 = vpop.f32.mrf.mxu0
    %466 = vmatprep.mubr.f32.mxu0 0.0
    %467 = vmatmul.mubr.f32.gmra.mxu0 %v249
    %v468 = vpop.f32.mrf.mxu0
    %v469 = vadd.f32 %v158, %v468
    %v470 = vpop.f32.mrf.mxu0
    %471 = vmatprep.mubr.f32.mxu0 0.0
    %472 = vmatmul.mubr.f32.gmra.mxu0 %v252
    %v473 = vpop.f32.mrf.mxu0
    %v474 = vadd.f32 %v158, %v473
    %v475 = vpop.f32.mrf.mxu0
    %476 = vmatprep.mubr.f32.mxu0 0.0
    %477 = vmatmul.mubr.f32.gmra.mxu0 %v255
    %v478 = vpop.f32.mrf.mxu0
    %v479 = vadd.f32 %v158, %v478
    %v480 = vpop.f32.mrf.mxu0
    %481 = vdwg.mxu0
    %v482 = vld [vmem:[%s4] sm:$0x1]
    %v484 = vlaneseq
    %v485 = vshrl.u32 %v484, 7
    %v486 = vsub.s32 0, %v485
    %v487 = vrot.slane %v482, %v486
    %490 = vset.pattern.permute.xlu0 3
    %491 = vperm.xlu0 %490, %v117
    %v492 = vpop.permute.xlu0 %491
    %495 = vset.pattern.permute.xlu0 3
    %496 = vperm.xlu0 %495, %v118
    %v497 = vpop.permute.xlu0 %496
    %500 = vset.pattern.permute.xlu0 3
    %501 = vperm.xlu0 %500, %v119
    %v502 = vpop.permute.xlu0 %501
    %505 = vset.pattern.permute.xlu0 3
    %506 = vperm.xlu0 %505, %v120
    %v507 = vpop.permute.xlu0 %506
    %510 = vset.pattern.permute.xlu0 3
    %511 = vperm.xlu0 %510, %v121
    %v512 = vpop.permute.xlu0 %511
    %515 = vset.pattern.permute.xlu0 3
    %516 = vperm.xlu0 %515, %v122
    %v517 = vpop.permute.xlu0 %516
    %520 = vset.pattern.permute.xlu0 3
    %521 = vperm.xlu0 %520, %v123
    %v522 = vpop.permute.xlu0 %521
    %525 = vset.pattern.permute.xlu0 3
    %526 = vperm.xlu0 %525, %v124
    %v527 = vpop.permute.xlu0 %526
    %530 = vset.pattern.permute.xlu0 3
    %531 = vperm.xlu0 %530, %v125
    %v532 = vpop.permute.xlu0 %531
    %535 = vset.pattern.permute.xlu0 3
    %536 = vperm.xlu0 %535, %v126
    %v537 = vpop.permute.xlu0 %536
    %540 = vset.pattern.permute.xlu0 3
    %541 = vperm.xlu0 %540, %v127
    %v542 = vpop.permute.xlu0 %541
    %545 = vset.pattern.permute.xlu0 3
    %546 = vperm.xlu0 %545, %v128
    %v547 = vpop.permute.xlu0 %546
    %550 = vset.pattern.permute.xlu0 3
    %551 = vperm.xlu0 %550, %v129
    %v552 = vpop.permute.xlu0 %551
    %555 = vset.pattern.permute.xlu0 3
    %556 = vperm.xlu0 %555, %v130
    %v557 = vpop.permute.xlu0 %556
    %560 = vset.pattern.permute.xlu0 3
    %561 = vperm.xlu0 %560, %v131
    %v562 = vpop.permute.xlu0 %561
    %565 = vset.pattern.permute.xlu0 3
    %566 = vperm.xlu0 %565, %v132
    %v567 = vpop.permute.xlu0 %566
    %570 = vset.pattern.permute.xlu0 3
    %571 = vperm.xlu0 %570, %v133
    %v572 = vpop.permute.xlu0 %571
    %575 = vset.pattern.permute.xlu0 3
    %576 = vperm.xlu0 %575, %v134
    %v577 = vpop.permute.xlu0 %576
    %580 = vset.pattern.permute.xlu0 3
    %581 = vperm.xlu0 %580, %v135
    %v582 = vpop.permute.xlu0 %581
    %585 = vset.pattern.permute.xlu0 3
    %586 = vperm.xlu0 %585, %v136
    %v587 = vpop.permute.xlu0 %586
    %590 = vset.pattern.permute.xlu0 3
    %591 = vperm.xlu0 %590, %v137
    %v592 = vpop.permute.xlu0 %591
    %595 = vset.pattern.permute.xlu0 3
    %596 = vperm.xlu0 %595, %v138
    %v597 = vpop.permute.xlu0 %596
    %600 = vset.pattern.permute.xlu0 3
    %601 = vperm.xlu0 %600, %v139
    %v602 = vpop.permute.xlu0 %601
    %605 = vset.pattern.permute.xlu0 3
    %606 = vperm.xlu0 %605, %v140
    %v607 = vpop.permute.xlu0 %606
    %610 = vset.pattern.permute.xlu0 3
    %611 = vperm.xlu0 %610, %v141
    %v612 = vpop.permute.xlu0 %611
    %615 = vset.pattern.permute.xlu0 3
    %616 = vperm.xlu0 %615, %v142
    %v617 = vpop.permute.xlu0 %616
    %620 = vset.pattern.permute.xlu0 3
    %621 = vperm.xlu0 %620, %v143
    %v622 = vpop.permute.xlu0 %621
    %625 = vset.pattern.permute.xlu0 3
    %626 = vperm.xlu0 %625, %v144
    %v627 = vpop.permute.xlu0 %626
    %630 = vset.pattern.permute.xlu0 3
    %631 = vperm.xlu0 %630, %v145
    %v632 = vpop.permute.xlu0 %631
    %635 = vset.pattern.permute.xlu0 3
    %636 = vperm.xlu0 %635, %v146
    %v637 = vpop.permute.xlu0 %636
    %640 = vset.pattern.permute.xlu0 3
    %641 = vperm.xlu0 %640, %v147
    %v642 = vpop.permute.xlu0 %641
    %645 = vset.pattern.permute.xlu0 3
    %646 = vperm.xlu0 %645, %v148
    %v647 = vpop.permute.xlu0 %646
    %vm649 = vcmp.eq.f32.partialorder %v487, %v492
    %vm650 = vcmp.eq.f32.partialorder %v487, %v497
    %vm651 = vcmp.eq.f32.partialorder %v487, %v502
    %vm652 = vcmp.eq.f32.partialorder %v487, %v507
    %vm653 = vcmp.eq.f32.partialorder %v487, %v512
    %vm654 = vcmp.eq.f32.partialorder %v487, %v517
    %vm655 = vcmp.eq.f32.partialorder %v487, %v522
    %vm656 = vcmp.eq.f32.partialorder %v487, %v527
    %vm657 = vcmp.eq.f32.partialorder %v487, %v532
    %vm658 = vcmp.eq.f32.partialorder %v487, %v537
    %vm659 = vcmp.eq.f32.partialorder %v487, %v542
    %vm660 = vcmp.eq.f32.partialorder %v487, %v547
    %vm661 = vcmp.eq.f32.partialorder %v487, %v552
    %vm662 = vcmp.eq.f32.partialorder %v487, %v557
    %vm663 = vcmp.eq.f32.partialorder %v487, %v562
    %vm664 = vcmp.eq.f32.partialorder %v487, %v567
    %vm665 = vcmp.eq.f32.partialorder %v487, %v572
    %vm666 = vcmp.eq.f32.partialorder %v487, %v577
    %vm667 = vcmp.eq.f32.partialorder %v487, %v582
    %vm668 = vcmp.eq.f32.partialorder %v487, %v587
    %vm669 = vcmp.eq.f32.partialorder %v487, %v592
    %vm670 = vcmp.eq.f32.partialorder %v487, %v597
    %vm671 = vcmp.eq.f32.partialorder %v487, %v602
    %vm672 = vcmp.eq.f32.partialorder %v487, %v607
    %vm673 = vcmp.eq.f32.partialorder %v487, %v612
    %vm674 = vcmp.eq.f32.partialorder %v487, %v617
    %vm675 = vcmp.eq.f32.partialorder %v487, %v622
    %vm676 = vcmp.eq.f32.partialorder %v487, %v627
    %vm677 = vcmp.eq.f32.partialorder %v487, %v632
    %vm678 = vcmp.eq.f32.partialorder %v487, %v637
    %vm679 = vcmp.eq.f32.partialorder %v487, %v642
    %vm680 = vcmp.eq.f32.partialorder %v487, %v647
    %v681 = vsel %vm649, %v324, 0.0
    %v682 = vsel %vm650, %v329, 0.0
    %v683 = vsel %vm651, %v334, 0.0
    %v684 = vsel %vm652, %v339, 0.0
    %v685 = vsel %vm653, %v344, 0.0
    %v686 = vsel %vm654, %v349, 0.0
    %v687 = vsel %vm655, %v354, 0.0
    %v688 = vsel %vm656, %v359, 0.0
    %v689 = vsel %vm657, %v364, 0.0
    %v690 = vsel %vm658, %v369, 0.0
    %v691 = vsel %vm659, %v374, 0.0
    %v692 = vsel %vm660, %v379, 0.0
    %v693 = vsel %vm661, %v384, 0.0
    %v694 = vsel %vm662, %v389, 0.0
    %v695 = vsel %vm663, %v394, 0.0
    %v696 = vsel %vm664, %v399, 0.0
    %v697 = vsel %vm665, %v404, 0.0
    %v698 = vsel %vm666, %v409, 0.0
    %v699 = vsel %vm667, %v414, 0.0
    %v700 = vsel %vm668, %v419, 0.0
    %v701 = vsel %vm669, %v424, 0.0
    %v702 = vsel %vm670, %v429, 0.0
    %v703 = vsel %vm671, %v434, 0.0
    %v704 = vsel %vm672, %v439, 0.0
    %v705 = vsel %vm673, %v444, 0.0
    %v706 = vsel %vm674, %v449, 0.0
    %v707 = vsel %vm675, %v454, 0.0
    %v708 = vsel %vm676, %v459, 0.0
    %v709 = vsel %vm677, %v464, 0.0
    %v710 = vsel %vm678, %v469, 0.0
    %v711 = vsel %vm679, %v474, 0.0
    %v712 = vsel %vm680, %v479, 0.0
    %v713 = vld [vmem:[%s5] sm:$0xff]
    %v714 = vld [vmem:[%s5 + $0x8] sm:$0x1]
    %vm715 = vcmask 72704
    %v717 = vsel %vm715, %v681, 0
    %v720 = vsel %vm715, %v682, 0
    %v723 = vsel %vm715, %v683, 0
    %v726 = vsel %vm715, %v684, 0
    %v729 = vsel %vm715, %v685, 0
    %v732 = vsel %vm715, %v686, 0
    %v735 = vsel %vm715, %v687, 0
    %v738 = vsel %vm715, %v688, 0
    %v741 = vsel %vm715, %v689, 0
    %v744 = vsel %vm715, %v690, 0
    %v747 = vsel %vm715, %v691, 0
    %v750 = vsel %vm715, %v692, 0
    %v753 = vsel %vm715, %v693, 0
    %v756 = vsel %vm715, %v694, 0
    %v759 = vsel %vm715, %v695, 0
    %v762 = vsel %vm715, %v696, 0
    %v765 = vsel %vm715, %v697, 0
    %v768 = vsel %vm715, %v698, 0
    %v771 = vsel %vm715, %v699, 0
    %v774 = vsel %vm715, %v700, 0
    %v777 = vsel %vm715, %v701, 0
    %v780 = vsel %vm715, %v702, 0
    %v783 = vsel %vm715, %v703, 0
    %v786 = vsel %vm715, %v704, 0
    %v789 = vsel %vm715, %v705, 0
    %v792 = vsel %vm715, %v706, 0
    %v795 = vsel %vm715, %v707, 0
    %v798 = vsel %vm715, %v708, 0
    %v801 = vsel %vm715, %v709, 0
    %v804 = vsel %vm715, %v710, 0
    %v807 = vsel %vm715, %v711, 0
    %v810 = vsel %vm715, %v712, 0
    %vm812 = vcmask 1040384
    %v814 = vsel %vm812, %v714, 0
    %816 = vmatprep.subr.mxu0 0.0
    %817 = vmatpush1.msra.mxu0 0.0
    %818 = vmatprep.subr.mxu0 0.0
    %819 = vmatpush1.msra.mxu0 0.0
    %820 = vmatprep.subr.mxu0 0.0
    %821 = vmatpush1.msra.mxu0 0.0
    %822 = vmatprep.subr.mxu0 0.0
    %823 = vmatpush1.msra.mxu0 0.0
    %824 = vmatprep.subr.mxu0 0.0
    %825 = vmatpush1.msra.mxu0 0.0
    %826 = vmatprep.subr.mxu0 0.0
    %827 = vmatpush1.msra.mxu0 0.0
    %828 = vmatprep.subr.mxu0 0.0
    %829 = vmatpush1.msra.mxu0 0.0
    %830 = vmatprep.subr.mxu0 0.0
    %831 = vmatpush1.msra.mxu0 0.0
    %832 = vmatprep.subr.mxu0 0.0
    %833 = vmatpush1.msra.mxu0 0.0
    %834 = vmatprep.subr.mxu0 0.0
    %835 = vmatpush1.msra.mxu0 0.0
    %836 = vmatprep.subr.mxu0 0.0
    %837 = vmatpush1.msra.mxu0 0.0
    %838 = vmatprep.subr.mxu0 0.0
    %839 = vmatpush1.msra.mxu0 0.0
    %840 = vmatprep.subr.mxu0 0.0
    %841 = vmatpush1.msra.mxu0 0.0
    %842 = vmatprep.subr.mxu0 0.0
    %843 = vmatpush1.msra.mxu0 0.0
    %844 = vmatprep.subr.mxu0 0.0
    %845 = vmatpush1.msra.mxu0 %v814
    %846 = vmatprep.subr.mxu0 0.0
    %847 = vmatpush1.msra.mxu0 %v713
    %848 = vmatprep.subr.mxu0 0.0
    %849 = vmatpush2.msra.mxu0 0.0
    %850 = vmatprep.subr.mxu0 0.0
    %851 = vmatpush2.msra.mxu0 0.0
    %852 = vmatprep.subr.mxu0 0.0
    %853 = vmatpush2.msra.mxu0 0.0
    %854 = vmatprep.subr.mxu0 0.0
    %855 = vmatpush2.msra.mxu0 0.0
    %856 = vmatprep.subr.mxu0 0.0
    %857 = vmatpush2.msra.mxu0 0.0
    %858 = vmatprep.subr.mxu0 0.0
    %859 = vmatpush2.msra.mxu0 0.0
    %860 = vmatprep.subr.mxu0 0.0
    %861 = vmatpush2.msra.mxu0 0.0
    %862 = vmatprep.subr.mxu0 0.0
    %863 = vmatpush2.msra.mxu0 0.0
    %864 = vmatprep.subr.mxu0 0.0
    %865 = vmatpush2.msra.mxu0 0.0
    %866 = vmatprep.subr.mxu0 0.0
    %867 = vmatpush2.msra.mxu0 0.0
    %868 = vmatprep.subr.mxu0 0.0
    %869 = vmatpush2.msra.mxu0 0.0
    %870 = vmatprep.subr.mxu0 0.0
    %871 = vmatpush2.msra.mxu0 0.0
    %872 = vmatprep.subr.mxu0 0.0
    %873 = vmatpush2.msra.mxu0 0.0
    %874 = vmatprep.subr.mxu0 0.0
    %875 = vmatpush2.msra.mxu0 0.0
    %876 = vmatprep.subr.mxu0 0.0
    %877 = vmatpush2.msra.mxu0 0.0
    %878 = vmatprep.subr.mxu0 0.0
    %879 = vmatpush2.msra.mxu0 0.0
    %880 = vmatprep.mubr.f32.mxu0 0.0
    %881 = vmatmul.mubr.f32.gmra.mxu0 %v717
    %v882 = vpop.f32.mrf.mxu0
    %v883 = vadd.f32 0.0, %v882
    %v884 = vpop.f32.mrf.mxu0
    %885 = vmatprep.mubr.f32.mxu0 0.0
    %886 = vmatmul.mubr.f32.gmra.mxu0 %v720
    %v887 = vpop.f32.mrf.mxu0
    %v888 = vadd.f32 0.0, %v887
    %v889 = vpop.f32.mrf.mxu0
    %890 = vmatprep.mubr.f32.mxu0 0.0
    %891 = vmatmul.mubr.f32.gmra.mxu0 %v723
    %v892 = vpop.f32.mrf.mxu0
    %v893 = vadd.f32 0.0, %v892
    %v894 = vpop.f32.mrf.mxu0
    %895 = vmatprep.mubr.f32.mxu0 0.0
    %896 = vmatmul.mubr.f32.gmra.mxu0 %v726
    %v897 = vpop.f32.mrf.mxu0
    %v898 = vadd.f32 0.0, %v897
    %v899 = vpop.f32.mrf.mxu0
    %900 = vmatprep.mubr.f32.mxu0 0.0
    %901 = vmatmul.mubr.f32.gmra.mxu0 %v729
    %v902 = vpop.f32.mrf.mxu0
    %v903 = vadd.f32 0.0, %v902
    %v904 = vpop.f32.mrf.mxu0
    %905 = vmatprep.mubr.f32.mxu0 0.0
    %906 = vmatmul.mubr.f32.gmra.mxu0 %v732
    %v907 = vpop.f32.mrf.mxu0
    %v908 = vadd.f32 0.0, %v907
    %v909 = vpop.f32.mrf.mxu0
    %910 = vmatprep.mubr.f32.mxu0 0.0
    %911 = vmatmul.mubr.f32.gmra.mxu0 %v735
    %v912 = vpop.f32.mrf.mxu0
    %v913 = vadd.f32 0.0, %v912
    %v914 = vpop.f32.mrf.mxu0
    %915 = vmatprep.mubr.f32.mxu0 0.0
    %916 = vmatmul.mubr.f32.gmra.mxu0 %v738
    %v917 = vpop.f32.mrf.mxu0
    %v918 = vadd.f32 0.0, %v917
    %v919 = vpop.f32.mrf.mxu0
    %920 = vmatprep.mubr.f32.mxu0 0.0
    %921 = vmatmul.mubr.f32.gmra.mxu0 %v741
    %v922 = vpop.f32.mrf.mxu0
    %v923 = vadd.f32 0.0, %v922
    %v924 = vpop.f32.mrf.mxu0
    %925 = vmatprep.mubr.f32.mxu0 0.0
    %926 = vmatmul.mubr.f32.gmra.mxu0 %v744
    %v927 = vpop.f32.mrf.mxu0
    %v928 = vadd.f32 0.0, %v927
    %v929 = vpop.f32.mrf.mxu0
    %930 = vmatprep.mubr.f32.mxu0 0.0
    %931 = vmatmul.mubr.f32.gmra.mxu0 %v747
    %v932 = vpop.f32.mrf.mxu0
    %v933 = vadd.f32 0.0, %v932
    %v934 = vpop.f32.mrf.mxu0
    %935 = vmatprep.mubr.f32.mxu0 0.0
    %936 = vmatmul.mubr.f32.gmra.mxu0 %v750
    %v937 = vpop.f32.mrf.mxu0
    %v938 = vadd.f32 0.0, %v937
    %v939 = vpop.f32.mrf.mxu0
    %940 = vmatprep.mubr.f32.mxu0 0.0
    %941 = vmatmul.mubr.f32.gmra.mxu0 %v753
    %v942 = vpop.f32.mrf.mxu0
    %v943 = vadd.f32 0.0, %v942
    %v944 = vpop.f32.mrf.mxu0
    %945 = vmatprep.mubr.f32.mxu0 0.0
    %946 = vmatmul.mubr.f32.gmra.mxu0 %v756
    %v947 = vpop.f32.mrf.mxu0
    %v948 = vadd.f32 0.0, %v947
    %v949 = vpop.f32.mrf.mxu0
    %950 = vmatprep.mubr.f32.mxu0 0.0
    %951 = vmatmul.mubr.f32.gmra.mxu0 %v759
    %v952 = vpop.f32.mrf.mxu0
    %v953 = vadd.f32 0.0, %v952
    %v954 = vpop.f32.mrf.mxu0
    %955 = vmatprep.mubr.f32.mxu0 0.0
    %956 = vmatmul.mubr.f32.gmra.mxu0 %v762
    %v957 = vpop.f32.mrf.mxu0
    %v958 = vadd.f32 0.0, %v957
    %v959 = vpop.f32.mrf.mxu0
    %960 = vmatprep.mubr.f32.mxu0 0.0
    %961 = vmatmul.mubr.f32.gmra.mxu0 %v765
    %v962 = vpop.f32.mrf.mxu0
    %v963 = vadd.f32 0.0, %v962
    %v964 = vpop.f32.mrf.mxu0
    %965 = vmatprep.mubr.f32.mxu0 0.0
    %966 = vmatmul.mubr.f32.gmra.mxu0 %v768
    %v967 = vpop.f32.mrf.mxu0
    %v968 = vadd.f32 0.0, %v967
    %v969 = vpop.f32.mrf.mxu0
    %970 = vmatprep.mubr.f32.mxu0 0.0
    %971 = vmatmul.mubr.f32.gmra.mxu0 %v771
    %v972 = vpop.f32.mrf.mxu0
    %v973 = vadd.f32 0.0, %v972
    %v974 = vpop.f32.mrf.mxu0
    %975 = vmatprep.mubr.f32.mxu0 0.0
    %976 = vmatmul.mubr.f32.gmra.mxu0 %v774
    %v977 = vpop.f32.mrf.mxu0
    %v978 = vadd.f32 0.0, %v977
    %v979 = vpop.f32.mrf.mxu0
    %980 = vmatprep.mubr.f32.mxu0 0.0
    %981 = vmatmul.mubr.f32.gmra.mxu0 %v777
    %v982 = vpop.f32.mrf.mxu0
    %v983 = vadd.f32 0.0, %v982
    %v984 = vpop.f32.mrf.mxu0
    %985 = vmatprep.mubr.f32.mxu0 0.0
    %986 = vmatmul.mubr.f32.gmra.mxu0 %v780
    %v987 = vpop.f32.mrf.mxu0
    %v988 = vadd.f32 0.0, %v987
    %v989 = vpop.f32.mrf.mxu0
    %990 = vmatprep.mubr.f32.mxu0 0.0
    %991 = vmatmul.mubr.f32.gmra.mxu0 %v783
    %v992 = vpop.f32.mrf.mxu0
    %v993 = vadd.f32 0.0, %v992
    %v994 = vpop.f32.mrf.mxu0
    %995 = vmatprep.mubr.f32.mxu0 0.0
    %996 = vmatmul.mubr.f32.gmra.mxu0 %v786
    %v997 = vpop.f32.mrf.mxu0
    %v998 = vadd.f32 0.0, %v997
    %v999 = vpop.f32.mrf.mxu0
    %1000 = vmatprep.mubr.f32.mxu0 0.0
    %1001 = vmatmul.mubr.f32.gmra.mxu0 %v789
    %v1002 = vpop.f32.mrf.mxu0
    %v1003 = vadd.f32 0.0, %v1002
    %v1004 = vpop.f32.mrf.mxu0
    %1005 = vmatprep.mubr.f32.mxu0 0.0
    %1006 = vmatmul.mubr.f32.gmra.mxu0 %v792
    %v1007 = vpop.f32.mrf.mxu0
    %v1008 = vadd.f32 0.0, %v1007
    %v1009 = vpop.f32.mrf.mxu0
    %1010 = vmatprep.mubr.f32.mxu0 0.0
    %1011 = vmatmul.mubr.f32.gmra.mxu0 %v795
    %v1012 = vpop.f32.mrf.mxu0
    %v1013 = vadd.f32 0.0, %v1012
    %v1014 = vpop.f32.mrf.mxu0
    %1015 = vmatprep.mubr.f32.mxu0 0.0
    %1016 = vmatmul.mubr.f32.gmra.mxu0 %v798
    %v1017 = vpop.f32.mrf.mxu0
    %v1018 = vadd.f32 0.0, %v1017
    %v1019 = vpop.f32.mrf.mxu0
    %1020 = vmatprep.mubr.f32.mxu0 0.0
    %1021 = vmatmul.mubr.f32.gmra.mxu0 %v801
    %v1022 = vpop.f32.mrf.mxu0
    %v1023 = vadd.f32 0.0, %v1022
    %v1024 = vpop.f32.mrf.mxu0
    %1025 = vmatprep.mubr.f32.mxu0 0.0
    %1026 = vmatmul.mubr.f32.gmra.mxu0 %v804
    %v1027 = vpop.f32.mrf.mxu0
    %v1028 = vadd.f32 0.0, %v1027
    %v1029 = vpop.f32.mrf.mxu0
    %1030 = vmatprep.mubr.f32.mxu0 0.0
    %1031 = vmatmul.mubr.f32.gmra.mxu0 %v807
    %v1032 = vpop.f32.mrf.mxu0
    %v1033 = vadd.f32 0.0, %v1032
    %v1034 = vpop.f32.mrf.mxu0
    %1035 = vmatprep.mubr.f32.mxu0 0.0
    %1036 = vmatmul.mubr.f32.gmra.mxu0 %v810
    %v1037 = vpop.f32.mrf.mxu0
    %v1038 = vadd.f32 0.0, %v1037
    %v1039 = vpop.f32.mrf.mxu0
    %1040 = vdwg.mxu0
    %1041 = vxpose.xlu0.b32.start [1/16] %v883, 128
    %1042 = vxpose.xlu0.b32.cont [2/16] %v888, 128
    %1043 = vxpose.xlu0.b32.cont [3/16] %v893, 128
    %1044 = vxpose.xlu0.b32.cont [4/16] %v898, 128
    %1045 = vxpose.xlu0.b32.cont [5/16] %v903, 128
    %1046 = vxpose.xlu0.b32.cont [6/16] %v908, 128
    %1047 = vxpose.xlu0.b32.cont [7/16] %v913, 128
    %1048 = vxpose.xlu0.b32.cont [8/16] %v918, 128
    %1049 = vxpose.xlu0.b32.cont [9/16] %v923, 128
    %1050 = vxpose.xlu0.b32.cont [10/16] %v928, 128
    %1051 = vxpose.xlu0.b32.cont [11/16] %v933, 128
    %1052 = vxpose.xlu0.b32.cont [12/16] %v938, 128
    %1053 = vxpose.xlu0.b32.cont [13/16] %v943, 128
    %1054 = vxpose.xlu0.b32.cont [14/16] %v948, 128
    %1055 = vxpose.xlu0.b32.cont [15/16] %v953, 128
    %1056 = vxpose.xlu0.b32.end [16/16] %v958, 128
    %v1057 = vpop.trf.xlu0
    %v1058 = vpop.trf.xlu0
    %v1059 = vpop.trf.xlu0
    %v1060 = vpop.trf.xlu0
    %v1061 = vpop.trf.xlu0
    %v1062 = vpop.trf.xlu0
    %v1063 = vpop.trf.xlu0
    %v1064 = vpop.trf.xlu0
    %v1065 = vpop.trf.xlu0
    %v1066 = vpop.trf.xlu0
    %v1067 = vpop.trf.xlu0
    %v1068 = vpop.trf.xlu0
    %v1069 = vpop.trf.xlu0
    %v1070 = vpop.trf.xlu0
    %v1071 = vpop.trf.xlu0
    %v1072 = vpop.trf.xlu0
    %1073 = vxpose.xlu0.b32.start [1/16] %v963, 128
    %1074 = vxpose.xlu0.b32.cont [2/16] %v968, 128
    %1075 = vxpose.xlu0.b32.cont [3/16] %v973, 128
    %1076 = vxpose.xlu0.b32.cont [4/16] %v978, 128
    %1077 = vxpose.xlu0.b32.cont [5/16] %v983, 128
    %1078 = vxpose.xlu0.b32.cont [6/16] %v988, 128
    %1079 = vxpose.xlu0.b32.cont [7/16] %v993, 128
    %1080 = vxpose.xlu0.b32.cont [8/16] %v998, 128
    %1081 = vxpose.xlu0.b32.cont [9/16] %v1003, 128
    %1082 = vxpose.xlu0.b32.cont [10/16] %v1008, 128
    %1083 = vxpose.xlu0.b32.cont [11/16] %v1013, 128
    %1084 = vxpose.xlu0.b32.cont [12/16] %v1018, 128
    %1085 = vxpose.xlu0.b32.cont [13/16] %v1023, 128
    %1086 = vxpose.xlu0.b32.cont [14/16] %v1028, 128
    %1087 = vxpose.xlu0.b32.cont [15/16] %v1033, 128
    %1088 = vxpose.xlu0.b32.end [16/16] %v1038, 128
    %v1089 = vpop.trf.xlu0
    %v1090 = vpop.trf.xlu0
    %v1091 = vpop.trf.xlu0
    %v1092 = vpop.trf.xlu0
    %v1093 = vpop.trf.xlu0
    %v1094 = vpop.trf.xlu0
    %v1095 = vpop.trf.xlu0
    %v1096 = vpop.trf.xlu0
    %v1097 = vpop.trf.xlu0
    %v1098 = vpop.trf.xlu0
    %v1099 = vpop.trf.xlu0
    %v1100 = vpop.trf.xlu0
    %v1101 = vpop.trf.xlu0
    %v1102 = vpop.trf.xlu0
    %v1103 = vpop.trf.xlu0
    %v1104 = vpop.trf.xlu0
    %v1107 = vcombine.low %v1057, %v1089
    %1109 = vst [vmem:[#allocation2] sm:$0x77] %v1107
    %v1110 = vsub.f32 %v883, %v117
    %v1111 = vsub.f32 %v888, %v118
    %v1112 = vsub.f32 %v893, %v119
    %v1113 = vsub.f32 %v898, %v120
    %v1114 = vsub.f32 %v903, %v121
    %v1115 = vsub.f32 %v908, %v122
    %v1116 = vsub.f32 %v913, %v123
    %v1117 = vsub.f32 %v918, %v124
    %v1118 = vsub.f32 %v923, %v125
    %v1119 = vsub.f32 %v928, %v126
    %v1120 = vsub.f32 %v933, %v127
    %v1121 = vsub.f32 %v938, %v128
    %v1122 = vsub.f32 %v943, %v129
    %v1123 = vsub.f32 %v948, %v130
    %v1124 = vsub.f32 %v953, %v131
    %v1125 = vsub.f32 %v958, %v132
    %v1126 = vsub.f32 %v963, %v133
    %v1127 = vsub.f32 %v968, %v134
    %v1128 = vsub.f32 %v973, %v135
    %v1129 = vsub.f32 %v978, %v136
    %v1130 = vsub.f32 %v983, %v137
    %v1131 = vsub.f32 %v988, %v138
    %v1132 = vsub.f32 %v993, %v139
    %v1133 = vsub.f32 %v998, %v140
    %v1134 = vsub.f32 %v1003, %v141
    %v1135 = vsub.f32 %v1008, %v142
    %v1136 = vsub.f32 %v1013, %v143
    %v1137 = vsub.f32 %v1018, %v144
    %v1138 = vsub.f32 %v1023, %v145
    %v1139 = vsub.f32 %v1028, %v146
    %v1140 = vsub.f32 %v1033, %v147
    %v1141 = vsub.f32 %v1038, %v148
    %v1142 = vand.u32 2147483647, %v1110
    %v1143 = vand.u32 2147483647, %v1111
    %v1144 = vand.u32 2147483647, %v1112
    %v1145 = vand.u32 2147483647, %v1113
    %v1146 = vand.u32 2147483647, %v1114
    %v1147 = vand.u32 2147483647, %v1115
    %v1148 = vand.u32 2147483647, %v1116
    %v1149 = vand.u32 2147483647, %v1117
    %v1150 = vand.u32 2147483647, %v1118
    %v1151 = vand.u32 2147483647, %v1119
    %v1152 = vand.u32 2147483647, %v1120
    %v1153 = vand.u32 2147483647, %v1121
    %v1154 = vand.u32 2147483647, %v1122
    %v1155 = vand.u32 2147483647, %v1123
    %v1156 = vand.u32 2147483647, %v1124
    %v1157 = vand.u32 2147483647, %v1125
    %v1158 = vand.u32 2147483647, %v1126
    %v1159 = vand.u32 2147483647, %v1127
    %v1160 = vand.u32 2147483647, %v1128
    %v1161 = vand.u32 2147483647, %v1129
    %v1162 = vand.u32 2147483647, %v1130
    %v1163 = vand.u32 2147483647, %v1131
    %v1164 = vand.u32 2147483647, %v1132
    %v1165 = vand.u32 2147483647, %v1133
    %v1166 = vand.u32 2147483647, %v1134
    %v1167 = vand.u32 2147483647, %v1135
    %v1168 = vand.u32 2147483647, %v1136
    %v1169 = vand.u32 2147483647, %v1137
    %v1170 = vand.u32 2147483647, %v1138
    %v1171 = vand.u32 2147483647, %v1139
    %v1172 = vand.u32 2147483647, %v1140
    %v1173 = vand.u32 2147483647, %v1141
    %v1174 = vadd.f32 %v1110, 1e-12
    %v1175 = vadd.f32 %v1111, 1e-12
    %v1176 = vadd.f32 %v1112, 1e-12
    %v1177 = vadd.f32 %v1113, 1e-12
    %v1178 = vadd.f32 %v1114, 1e-12
    %v1179 = vadd.f32 %v1115, 1e-12
    %v1180 = vadd.f32 %v1116, 1e-12
    %v1181 = vadd.f32 %v1117, 1e-12
    %v1182 = vadd.f32 %v1118, 1e-12
    %v1183 = vadd.f32 %v1119, 1e-12
    %v1184 = vadd.f32 %v1120, 1e-12
    %v1185 = vadd.f32 %v1121, 1e-12
    %v1186 = vadd.f32 %v1122, 1e-12
    %v1187 = vadd.f32 %v1123, 1e-12
    %v1188 = vadd.f32 %v1124, 1e-12
    %v1189 = vadd.f32 %v1125, 1e-12
    %v1190 = vadd.f32 %v1126, 1e-12
    %v1191 = vadd.f32 %v1127, 1e-12
    %v1192 = vadd.f32 %v1128, 1e-12
    %v1193 = vadd.f32 %v1129, 1e-12
    %v1194 = vadd.f32 %v1130, 1e-12
    %v1195 = vadd.f32 %v1131, 1e-12
    %v1196 = vadd.f32 %v1132, 1e-12
    %v1197 = vadd.f32 %v1133, 1e-12
    %v1198 = vadd.f32 %v1134, 1e-12
    %v1199 = vadd.f32 %v1135, 1e-12
    %v1200 = vadd.f32 %v1136, 1e-12
    %v1201 = vadd.f32 %v1137, 1e-12
    %v1202 = vadd.f32 %v1138, 1e-12
    %v1203 = vadd.f32 %v1139, 1e-12
    %v1204 = vadd.f32 %v1140, 1e-12
    %v1205 = vadd.f32 %v1141, 1e-12
    %v1206 = vand.u32 2147483647, %v1174
    %v1207 = vand.u32 2147483647, %v1175
    %v1208 = vand.u32 2147483647, %v1176
    %v1209 = vand.u32 2147483647, %v1177
    %v1210 = vand.u32 2147483647, %v1178
    %v1211 = vand.u32 2147483647, %v1179
    %v1212 = vand.u32 2147483647, %v1180
    %v1213 = vand.u32 2147483647, %v1181
    %v1214 = vand.u32 2147483647, %v1182
    %v1215 = vand.u32 2147483647, %v1183
    %v1216 = vand.u32 2147483647, %v1184
    %v1217 = vand.u32 2147483647, %v1185
    %v1218 = vand.u32 2147483647, %v1186
    %v1219 = vand.u32 2147483647, %v1187
    %v1220 = vand.u32 2147483647, %v1188
    %v1221 = vand.u32 2147483647, %v1189
    %v1222 = vand.u32 2147483647, %v1190
    %v1223 = vand.u32 2147483647, %v1191
    %v1224 = vand.u32 2147483647, %v1192
    %v1225 = vand.u32 2147483647, %v1193
    %v1226 = vand.u32 2147483647, %v1194
    %v1227 = vand.u32 2147483647, %v1195
    %v1228 = vand.u32 2147483647, %v1196
    %v1229 = vand.u32 2147483647, %v1197
    %v1230 = vand.u32 2147483647, %v1198
    %v1231 = vand.u32 2147483647, %v1199
    %v1232 = vand.u32 2147483647, %v1200
    %v1233 = vand.u32 2147483647, %v1201
    %v1234 = vand.u32 2147483647, %v1202
    %v1235 = vand.u32 2147483647, %v1203
    %v1236 = vand.u32 2147483647, %v1204
    %v1237 = vand.u32 2147483647, %v1205
    %v1238 = vmul.f32 %v1206, -2.0
    %v1239 = vmul.f32 %v1207, -2.0
    %v1240 = vmul.f32 %v1208, -2.0
    %v1241 = vmul.f32 %v1209, -2.0
    %v1242 = vmul.f32 %v1210, -2.0
    %v1243 = vmul.f32 %v1211, -2.0
    %v1244 = vmul.f32 %v1212, -2.0
    %v1245 = vmul.f32 %v1213, -2.0
    %v1246 = vmul.f32 %v1214, -2.0
    %v1247 = vmul.f32 %v1215, -2.0
    %v1248 = vmul.f32 %v1216, -2.0
    %v1249 = vmul.f32 %v1217, -2.0
    %v1250 = vmul.f32 %v1218, -2.0
    %v1251 = vmul.f32 %v1219, -2.0
    %v1252 = vmul.f32 %v1220, -2.0
    %v1253 = vmul.f32 %v1221, -2.0
    %v1254 = vmul.f32 %v1222, -2.0
    %v1255 = vmul.f32 %v1223, -2.0
    %v1256 = vmul.f32 %v1224, -2.0
    %v1257 = vmul.f32 %v1225, -2.0
    %v1258 = vmul.f32 %v1226, -2.0
    %v1259 = vmul.f32 %v1227, -2.0
    %v1260 = vmul.f32 %v1228, -2.0
    %v1261 = vmul.f32 %v1229, -2.0
    %v1262 = vmul.f32 %v1230, -2.0
    %v1263 = vmul.f32 %v1231, -2.0
    %v1264 = vmul.f32 %v1232, -2.0
    %v1265 = vmul.f32 %v1233, -2.0
    %v1266 = vmul.f32 %v1234, -2.0
    %v1267 = vmul.f32 %v1235, -2.0
    %v1268 = vmul.f32 %v1236, -2.0
    %v1269 = vmul.f32 %v1237, -2.0
    %v1270 = vmul.f32 %v1238, 1.442695
    %v1271 = vpow.pop %v1270
    %v1272 = vmul.f32 %v1239, 1.442695
    %v1273 = vpow.pop %v1272
    %v1274 = vmul.f32 %v1240, 1.442695
    %v1275 = vpow.pop %v1274
    %v1276 = vmul.f32 %v1241, 1.442695
    %v1277 = vpow.pop %v1276
    %v1278 = vmul.f32 %v1242, 1.442695
    %v1279 = vpow.pop %v1278
    %v1280 = vmul.f32 %v1243, 1.442695
    %v1281 = vpow.pop %v1280
    %v1282 = vmul.f32 %v1244, 1.442695
    %v1283 = vpow.pop %v1282
    %v1284 = vmul.f32 %v1245, 1.442695
    %v1285 = vpow.pop %v1284
    %v1286 = vmul.f32 %v1246, 1.442695
    %v1287 = vpow.pop %v1286
    %v1288 = vmul.f32 %v1247, 1.442695
    %v1289 = vpow.pop %v1288
    %v1290 = vmul.f32 %v1248, 1.442695
    %v1291 = vpow.pop %v1290
    %v1292 = vmul.f32 %v1249, 1.442695
    %v1293 = vpow.pop %v1292
    %v1294 = vmul.f32 %v1250, 1.442695
    %v1295 = vpow.pop %v1294
    %v1296 = vmul.f32 %v1251, 1.442695
    %v1297 = vpow.pop %v1296
    %v1298 = vmul.f32 %v1252, 1.442695
    %v1299 = vpow.pop %v1298
    %v1300 = vmul.f32 %v1253, 1.442695
    %v1301 = vpow.pop %v1300
    %v1302 = vmul.f32 %v1254, 1.442695
    %v1303 = vpow.pop %v1302
    %v1304 = vmul.f32 %v1255, 1.442695
    %v1305 = vpow.pop %v1304
    %v1306 = vmul.f32 %v1256, 1.442695
    %v1307 = vpow.pop %v1306
    %v1308 = vmul.f32 %v1257, 1.442695
    %v1309 = vpow.pop %v1308
    %v1310 = vmul.f32 %v1258, 1.442695
    %v1311 = vpow.pop %v1310
    %v1312 = vmul.f32 %v1259, 1.442695
    %v1313 = vpow.pop %v1312
    %v1314 = vmul.f32 %v1260, 1.442695
    %v1315 = vpow.pop %v1314
    %v1316 = vmul.f32 %v1261, 1.442695
    %v1317 = vpow.pop %v1316
    %v1318 = vmul.f32 %v1262, 1.442695
    %v1319 = vpow.pop %v1318
    %v1320 = vmul.f32 %v1263, 1.442695
    %v1321 = vpow.pop %v1320
    %v1322 = vmul.f32 %v1264, 1.442695
    %v1323 = vpow.pop %v1322
    %v1324 = vmul.f32 %v1265, 1.442695
    %v1325 = vpow.pop %v1324
    %v1326 = vmul.f32 %v1266, 1.442695
    %v1327 = vpow.pop %v1326
    %v1328 = vmul.f32 %v1267, 1.442695
    %v1329 = vpow.pop %v1328
    %v1330 = vmul.f32 %v1268, 1.442695
    %v1331 = vpow.pop %v1330
    %v1332 = vmul.f32 %v1269, 1.442695
    %v1333 = vpow.pop %v1332
    %v1334 = vadd.f32 %v1271, 1.0
    %v1335 = vlog2.pop %v1334
    %v1336 = vmul.f32 %v1335, 0.6931472
    %v1337 = vmul.f32 -0.5, %v1271
    %v1338 = vadd.f32 %v1337, 1.0
    %v1339 = vmul.f32 %v1338, %v1271
    %v1340 = vand.u32 2147483647, %v1271
    %vm1341 = vcmp.lt.f32.partialorder %v1340, 0.0004427343
    %v1342 = vsel %vm1341, %v1339, %v1336
    %v1343 = vadd.f32 %v1273, 1.0
    %v1344 = vlog2.pop %v1343
    %v1345 = vmul.f32 %v1344, 0.6931472
    %v1346 = vmul.f32 -0.5, %v1273
    %v1347 = vadd.f32 %v1346, 1.0
    %v1348 = vmul.f32 %v1347, %v1273
    %v1349 = vand.u32 2147483647, %v1273
    %vm1350 = vcmp.lt.f32.partialorder %v1349, 0.0004427343
    %v1351 = vsel %vm1350, %v1348, %v1345
    %v1352 = vadd.f32 %v1275, 1.0
    %v1353 = vlog2.pop %v1352
    %v1354 = vmul.f32 %v1353, 0.6931472
    %v1355 = vmul.f32 -0.5, %v1275
    %v1356 = vadd.f32 %v1355, 1.0
    %v1357 = vmul.f32 %v1356, %v1275
    %v1358 = vand.u32 2147483647, %v1275
    %vm1359 = vcmp.lt.f32.partialorder %v1358, 0.0004427343
    %v1360 = vsel %vm1359, %v1357, %v1354
    %v1361 = vadd.f32 %v1277, 1.0
    %v1362 = vlog2.pop %v1361
    %v1363 = vmul.f32 %v1362, 0.6931472
    %v1364 = vmul.f32 -0.5, %v1277
    %v1365 = vadd.f32 %v1364, 1.0
    %v1366 = vmul.f32 %v1365, %v1277
    %v1367 = vand.u32 2147483647, %v1277
    %vm1368 = vcmp.lt.f32.partialorder %v1367, 0.0004427343
    %v1369 = vsel %vm1368, %v1366, %v1363
    %v1370 = vadd.f32 %v1279, 1.0
    %v1371 = vlog2.pop %v1370
    %v1372 = vmul.f32 %v1371, 0.6931472
    %v1373 = vmul.f32 -0.5, %v1279
    %v1374 = vadd.f32 %v1373, 1.0
    %v1375 = vmul.f32 %v1374, %v1279
    %v1376 = vand.u32 2147483647, %v1279
    %vm1377 = vcmp.lt.f32.partialorder %v1376, 0.0004427343
    %v1378 = vsel %vm1377, %v1375, %v1372
    %v1379 = vadd.f32 %v1281, 1.0
    %v1380 = vlog2.pop %v1379
    %v1381 = vmul.f32 %v1380, 0.6931472
    %v1382 = vmul.f32 -0.5, %v1281
    %v1383 = vadd.f32 %v1382, 1.0
    %v1384 = vmul.f32 %v1383, %v1281
    %v1385 = vand.u32 2147483647, %v1281
    %vm1386 = vcmp.lt.f32.partialorder %v1385, 0.0004427343
    %v1387 = vsel %vm1386, %v1384, %v1381
    %v1388 = vadd.f32 %v1283, 1.0
    %v1389 = vlog2.pop %v1388
    %v1390 = vmul.f32 %v1389, 0.6931472
    %v1391 = vmul.f32 -0.5, %v1283
    %v1392 = vadd.f32 %v1391, 1.0
    %v1393 = vmul.f32 %v1392, %v1283
    %v1394 = vand.u32 2147483647, %v1283
    %vm1395 = vcmp.lt.f32.partialorder %v1394, 0.0004427343
    %v1396 = vsel %vm1395, %v1393, %v1390
    %v1397 = vadd.f32 %v1285, 1.0
    %v1398 = vlog2.pop %v1397
    %v1399 = vmul.f32 %v1398, 0.6931472
    %v1400 = vmul.f32 -0.5, %v1285
    %v1401 = vadd.f32 %v1400, 1.0
    %v1402 = vmul.f32 %v1401, %v1285
    %v1403 = vand.u32 2147483647, %v1285
    %vm1404 = vcmp.lt.f32.partialorder %v1403, 0.0004427343
    %v1405 = vsel %vm1404, %v1402, %v1399
    %v1406 = vadd.f32 %v1287, 1.0
    %v1407 = vlog2.pop %v1406
    %v1408 = vmul.f32 %v1407, 0.6931472
    %v1409 = vmul.f32 -0.5, %v1287
    %v1410 = vadd.f32 %v1409, 1.0
    %v1411 = vmul.f32 %v1410, %v1287
    %v1412 = vand.u32 2147483647, %v1287
    %vm1413 = vcmp.lt.f32.partialorder %v1412, 0.0004427343
    %v1414 = vsel %vm1413, %v1411, %v1408
    %v1415 = vadd.f32 %v1289, 1.0
    %v1416 = vlog2.pop %v1415
    %v1417 = vmul.f32 %v1416, 0.6931472
    %v1418 = vmul.f32 -0.5, %v1289
    %v1419 = vadd.f32 %v1418, 1.0
    %v1420 = vmul.f32 %v1419, %v1289
    %v1421 = vand.u32 2147483647, %v1289
    %vm1422 = vcmp.lt.f32.partialorder %v1421, 0.0004427343
    %v1423 = vsel %vm1422, %v1420, %v1417
    %v1424 = vadd.f32 %v1291, 1.0
    %v1425 = vlog2.pop %v1424
    %v1426 = vmul.f32 %v1425, 0.6931472
    %v1427 = vmul.f32 -0.5, %v1291
    %v1428 = vadd.f32 %v1427, 1.0
    %v1429 = vmul.f32 %v1428, %v1291
    %v1430 = vand.u32 2147483647, %v1291
    %vm1431 = vcmp.lt.f32.partialorder %v1430, 0.0004427343
    %v1432 = vsel %vm1431, %v1429, %v1426
    %v1433 = vadd.f32 %v1293, 1.0
    %v1434 = vlog2.pop %v1433
    %v1435 = vmul.f32 %v1434, 0.6931472
    %v1436 = vmul.f32 -0.5, %v1293
    %v1437 = vadd.f32 %v1436, 1.0
    %v1438 = vmul.f32 %v1437, %v1293
    %v1439 = vand.u32 2147483647, %v1293
    %vm1440 = vcmp.lt.f32.partialorder %v1439, 0.0004427343
    %v1441 = vsel %vm1440, %v1438, %v1435
    %v1442 = vadd.f32 %v1295, 1.0
    %v1443 = vlog2.pop %v1442
    %v1444 = vmul.f32 %v1443, 0.6931472
    %v1445 = vmul.f32 -0.5, %v1295
    %v1446 = vadd.f32 %v1445, 1.0
    %v1447 = vmul.f32 %v1446, %v1295
    %v1448 = vand.u32 2147483647, %v1295
    %vm1449 = vcmp.lt.f32.partialorder %v1448, 0.0004427343
    %v1450 = vsel %vm1449, %v1447, %v1444
    %v1451 = vadd.f32 %v1297, 1.0
    %v1452 = vlog2.pop %v1451
    %v1453 = vmul.f32 %v1452, 0.6931472
    %v1454 = vmul.f32 -0.5, %v1297
    %v1455 = vadd.f32 %v1454, 1.0
    %v1456 = vmul.f32 %v1455, %v1297
    %v1457 = vand.u32 2147483647, %v1297
    %vm1458 = vcmp.lt.f32.partialorder %v1457, 0.0004427343
    %v1459 = vsel %vm1458, %v1456, %v1453
    %v1460 = vadd.f32 %v1299, 1.0
    %v1461 = vlog2.pop %v1460
    %v1462 = vmul.f32 %v1461, 0.6931472
    %v1463 = vmul.f32 -0.5, %v1299
    %v1464 = vadd.f32 %v1463, 1.0
    %v1465 = vmul.f32 %v1464, %v1299
    %v1466 = vand.u32 2147483647, %v1299
    %vm1467 = vcmp.lt.f32.partialorder %v1466, 0.0004427343
    %v1468 = vsel %vm1467, %v1465, %v1462
    %v1469 = vadd.f32 %v1301, 1.0
    %v1470 = vlog2.pop %v1469
    %v1471 = vmul.f32 %v1470, 0.6931472
    %v1472 = vmul.f32 -0.5, %v1301
    %v1473 = vadd.f32 %v1472, 1.0
    %v1474 = vmul.f32 %v1473, %v1301
    %v1475 = vand.u32 2147483647, %v1301
    %vm1476 = vcmp.lt.f32.partialorder %v1475, 0.0004427343
    %v1477 = vsel %vm1476, %v1474, %v1471
    %v1478 = vadd.f32 %v1303, 1.0
    %v1479 = vlog2.pop %v1478
    %v1480 = vmul.f32 %v1479, 0.6931472
    %v1481 = vmul.f32 -0.5, %v1303
    %v1482 = vadd.f32 %v1481, 1.0
    %v1483 = vmul.f32 %v1482, %v1303
    %v1484 = vand.u32 2147483647, %v1303
    %vm1485 = vcmp.lt.f32.partialorder %v1484, 0.0004427343
    %v1486 = vsel %vm1485, %v1483, %v1480
    %v1487 = vadd.f32 %v1305, 1.0
    %v1488 = vlog2.pop %v1487
    %v1489 = vmul.f32 %v1488, 0.6931472
    %v1490 = vmul.f32 -0.5, %v1305
    %v1491 = vadd.f32 %v1490, 1.0
    %v1492 = vmul.f32 %v1491, %v1305
    %v1493 = vand.u32 2147483647, %v1305
    %vm1494 = vcmp.lt.f32.partialorder %v1493, 0.0004427343
    %v1495 = vsel %vm1494, %v1492, %v1489
    %v1496 = vadd.f32 %v1307, 1.0
    %v1497 = vlog2.pop %v1496
    %v1498 = vmul.f32 %v1497, 0.6931472
    %v1499 = vmul.f32 -0.5, %v1307
    %v1500 = vadd.f32 %v1499, 1.0
    %v1501 = vmul.f32 %v1500, %v1307
    %v1502 = vand.u32 2147483647, %v1307
    %vm1503 = vcmp.lt.f32.partialorder %v1502, 0.0004427343
    %v1504 = vsel %vm1503, %v1501, %v1498
    %v1505 = vadd.f32 %v1309, 1.0
    %v1506 = vlog2.pop %v1505
    %v1507 = vmul.f32 %v1506, 0.6931472
    %v1508 = vmul.f32 -0.5, %v1309
    %v1509 = vadd.f32 %v1508, 1.0
    %v1510 = vmul.f32 %v1509, %v1309
    %v1511 = vand.u32 2147483647, %v1309
    %vm1512 = vcmp.lt.f32.partialorder %v1511, 0.0004427343
    %v1513 = vsel %vm1512, %v1510, %v1507
    %v1514 = vadd.f32 %v1311, 1.0
    %v1515 = vlog2.pop %v1514
    %v1516 = vmul.f32 %v1515, 0.6931472
    %v1517 = vmul.f32 -0.5, %v1311
    %v1518 = vadd.f32 %v1517, 1.0
    %v1519 = vmul.f32 %v1518, %v1311
    %v1520 = vand.u32 2147483647, %v1311
    %vm1521 = vcmp.lt.f32.partialorder %v1520, 0.0004427343
    %v1522 = vsel %vm1521, %v1519, %v1516
    %v1523 = vadd.f32 %v1313, 1.0
    %v1524 = vlog2.pop %v1523
    %v1525 = vmul.f32 %v1524, 0.6931472
    %v1526 = vmul.f32 -0.5, %v1313
    %v1527 = vadd.f32 %v1526, 1.0
    %v1528 = vmul.f32 %v1527, %v1313
    %v1529 = vand.u32 2147483647, %v1313
    %vm1530 = vcmp.lt.f32.partialorder %v1529, 0.0004427343
    %v1531 = vsel %vm1530, %v1528, %v1525
    %v1532 = vadd.f32 %v1315, 1.0
    %v1533 = vlog2.pop %v1532
    %v1534 = vmul.f32 %v1533, 0.6931472
    %v1535 = vmul.f32 -0.5, %v1315
    %v1536 = vadd.f32 %v1535, 1.0
    %v1537 = vmul.f32 %v1536, %v1315
    %v1538 = vand.u32 2147483647, %v1315
    %vm1539 = vcmp.lt.f32.partialorder %v1538, 0.0004427343
    %v1540 = vsel %vm1539, %v1537, %v1534
    %v1541 = vadd.f32 %v1317, 1.0
    %v1542 = vlog2.pop %v1541
    %v1543 = vmul.f32 %v1542, 0.6931472
    %v1544 = vmul.f32 -0.5, %v1317
    %v1545 = vadd.f32 %v1544, 1.0
    %v1546 = vmul.f32 %v1545, %v1317
    %v1547 = vand.u32 2147483647, %v1317
    %vm1548 = vcmp.lt.f32.partialorder %v1547, 0.0004427343
    %v1549 = vsel %vm1548, %v1546, %v1543
    %v1550 = vadd.f32 %v1319, 1.0
    %v1551 = vlog2.pop %v1550
    %v1552 = vmul.f32 %v1551, 0.6931472
    %v1553 = vmul.f32 -0.5, %v1319
    %v1554 = vadd.f32 %v1553, 1.0
    %v1555 = vmul.f32 %v1554, %v1319
    %v1556 = vand.u32 2147483647, %v1319
    %vm1557 = vcmp.lt.f32.partialorder %v1556, 0.0004427343
    %v1558 = vsel %vm1557, %v1555, %v1552
    %v1559 = vadd.f32 %v1321, 1.0
    %v1560 = vlog2.pop %v1559
    %v1561 = vmul.f32 %v1560, 0.6931472
    %v1562 = vmul.f32 -0.5, %v1321
    %v1563 = vadd.f32 %v1562, 1.0
    %v1564 = vmul.f32 %v1563, %v1321
    %v1565 = vand.u32 2147483647, %v1321
    %vm1566 = vcmp.lt.f32.partialorder %v1565, 0.0004427343
    %v1567 = vsel %vm1566, %v1564, %v1561
    %v1568 = vadd.f32 %v1323, 1.0
    %v1569 = vlog2.pop %v1568
    %v1570 = vmul.f32 %v1569, 0.6931472
    %v1571 = vmul.f32 -0.5, %v1323
    %v1572 = vadd.f32 %v1571, 1.0
    %v1573 = vmul.f32 %v1572, %v1323
    %v1574 = vand.u32 2147483647, %v1323
    %vm1575 = vcmp.lt.f32.partialorder %v1574, 0.0004427343
    %v1576 = vsel %vm1575, %v1573, %v1570
    %v1577 = vadd.f32 %v1325, 1.0
    %v1578 = vlog2.pop %v1577
    %v1579 = vmul.f32 %v1578, 0.6931472
    %v1580 = vmul.f32 -0.5, %v1325
    %v1581 = vadd.f32 %v1580, 1.0
    %v1582 = vmul.f32 %v1581, %v1325
    %v1583 = vand.u32 2147483647, %v1325
    %vm1584 = vcmp.lt.f32.partialorder %v1583, 0.0004427343
    %v1585 = vsel %vm1584, %v1582, %v1579
    %v1586 = vadd.f32 %v1327, 1.0
    %v1587 = vlog2.pop %v1586
    %v1588 = vmul.f32 %v1587, 0.6931472
    %v1589 = vmul.f32 -0.5, %v1327
    %v1590 = vadd.f32 %v1589, 1.0
    %v1591 = vmul.f32 %v1590, %v1327
    %v1592 = vand.u32 2147483647, %v1327
    %vm1593 = vcmp.lt.f32.partialorder %v1592, 0.0004427343
    %v1594 = vsel %vm1593, %v1591, %v1588
    %v1595 = vadd.f32 %v1329, 1.0
    %v1596 = vlog2.pop %v1595
    %v1597 = vmul.f32 %v1596, 0.6931472
    %v1598 = vmul.f32 -0.5, %v1329
    %v1599 = vadd.f32 %v1598, 1.0
    %v1600 = vmul.f32 %v1599, %v1329
    %v1601 = vand.u32 2147483647, %v1329
    %vm1602 = vcmp.lt.f32.partialorder %v1601, 0.0004427343
    %v1603 = vsel %vm1602, %v1600, %v1597
    %v1604 = vadd.f32 %v1331, 1.0
    %v1605 = vlog2.pop %v1604
    %v1606 = vmul.f32 %v1605, 0.6931472
    %v1607 = vmul.f32 -0.5, %v1331
    %v1608 = vadd.f32 %v1607, 1.0
    %v1609 = vmul.f32 %v1608, %v1331
    %v1610 = vand.u32 2147483647, %v1331
    %vm1611 = vcmp.lt.f32.partialorder %v1610, 0.0004427343
    %v1612 = vsel %vm1611, %v1609, %v1606
    %v1613 = vadd.f32 %v1333, 1.0
    %v1614 = vlog2.pop %v1613
    %v1615 = vmul.f32 %v1614, 0.6931472
    %v1616 = vmul.f32 -0.5, %v1333
    %v1617 = vadd.f32 %v1616, 1.0
    %v1618 = vmul.f32 %v1617, %v1333
    %v1619 = vand.u32 2147483647, %v1333
    %vm1620 = vcmp.lt.f32.partialorder %v1619, 0.0004427343
    %v1621 = vsel %vm1620, %v1618, %v1615
    %v1622 = vadd.f32 %v1206, %v1342
    %v1623 = vadd.f32 %v1207, %v1351
    %v1624 = vadd.f32 %v1208, %v1360
    %v1625 = vadd.f32 %v1209, %v1369
    %v1626 = vadd.f32 %v1210, %v1378
    %v1627 = vadd.f32 %v1211, %v1387
    %v1628 = vadd.f32 %v1212, %v1396
    %v1629 = vadd.f32 %v1213, %v1405
    %v1630 = vadd.f32 %v1214, %v1414
    %v1631 = vadd.f32 %v1215, %v1423
    %v1632 = vadd.f32 %v1216, %v1432
    %v1633 = vadd.f32 %v1217, %v1441
    %v1634 = vadd.f32 %v1218, %v1450
    %v1635 = vadd.f32 %v1219, %v1459
    %v1636 = vadd.f32 %v1220, %v1468
    %v1637 = vadd.f32 %v1221, %v1477
    %v1638 = vadd.f32 %v1222, %v1486
    %v1639 = vadd.f32 %v1223, %v1495
    %v1640 = vadd.f32 %v1224, %v1504
    %v1641 = vadd.f32 %v1225, %v1513
    %v1642 = vadd.f32 %v1226, %v1522
    %v1643 = vadd.f32 %v1227, %v1531
    %v1644 = vadd.f32 %v1228, %v1540
    %v1645 = vadd.f32 %v1229, %v1549
    %v1646 = vadd.f32 %v1230, %v1558
    %v1647 = vadd.f32 %v1231, %v1567
    %v1648 = vadd.f32 %v1232, %v1576
    %v1649 = vadd.f32 %v1233, %v1585
    %v1650 = vadd.f32 %v1234, %v1594
    %v1651 = vadd.f32 %v1235, %v1603
    %v1652 = vadd.f32 %v1236, %v1612
    %v1653 = vadd.f32 %v1237, %v1621
    %v1654 = vsub.f32 %v1622, 0.6931472
    %v1655 = vsub.f32 %v1623, 0.6931472
    %v1656 = vsub.f32 %v1624, 0.6931472
    %v1657 = vsub.f32 %v1625, 0.6931472
    %v1658 = vsub.f32 %v1626, 0.6931472
    %v1659 = vsub.f32 %v1627, 0.6931472
    %v1660 = vsub.f32 %v1628, 0.6931472
    %v1661 = vsub.f32 %v1629, 0.6931472
    %v1662 = vsub.f32 %v1630, 0.6931472
    %v1663 = vsub.f32 %v1631, 0.6931472
    %v1664 = vsub.f32 %v1632, 0.6931472
    %v1665 = vsub.f32 %v1633, 0.6931472
    %v1666 = vsub.f32 %v1634, 0.6931472
    %v1667 = vsub.f32 %v1635, 0.6931472
    %v1668 = vsub.f32 %v1636, 0.6931472
    %v1669 = vsub.f32 %v1637, 0.6931472
    %v1670 = vsub.f32 %v1638, 0.6931472
    %v1671 = vsub.f32 %v1639, 0.6931472
    %v1672 = vsub.f32 %v1640, 0.6931472
    %v1673 = vsub.f32 %v1641, 0.6931472
    %v1674 = vsub.f32 %v1642, 0.6931472
    %v1675 = vsub.f32 %v1643, 0.6931472
    %v1676 = vsub.f32 %v1644, 0.6931472
    %v1677 = vsub.f32 %v1645, 0.6931472
    %v1678 = vsub.f32 %v1646, 0.6931472
    %v1679 = vsub.f32 %v1647, 0.6931472
    %v1680 = vsub.f32 %v1648, 0.6931472
    %v1681 = vsub.f32 %v1649, 0.6931472
    %v1682 = vsub.f32 %v1650, 0.6931472
    %v1683 = vsub.f32 %v1651, 0.6931472
    %v1684 = vsub.f32 %v1652, 0.6931472
    %v1685 = vsub.f32 %v1653, 0.6931472
    %v1686 = vld [vmem:[#allocation4] sm:$0x1]
    %1687 = vset.pattern.permute.xlu0 4
    %1688 = vperm.xlu0 %1687, %v117
    %v1689 = vpop.permute.xlu0 %1688
    %1691 = vset.pattern.permute.xlu0 4
    %1692 = vperm.xlu0 %1691, %v118
    %v1693 = vpop.permute.xlu0 %1692
    %1695 = vset.pattern.permute.xlu0 4
    %1696 = vperm.xlu0 %1695, %v119
    %v1697 = vpop.permute.xlu0 %1696
    %1699 = vset.pattern.permute.xlu0 4
    %1700 = vperm.xlu0 %1699, %v120
    %v1701 = vpop.permute.xlu0 %1700
    %1703 = vset.pattern.permute.xlu0 4
    %1704 = vperm.xlu0 %1703, %v121
    %v1705 = vpop.permute.xlu0 %1704
    %1707 = vset.pattern.permute.xlu0 4
    %1708 = vperm.xlu0 %1707, %v122
    %v1709 = vpop.permute.xlu0 %1708
    %1711 = vset.pattern.permute.xlu0 4
    %1712 = vperm.xlu0 %1711, %v123
    %v1713 = vpop.permute.xlu0 %1712
    %1715 = vset.pattern.permute.xlu0 4
    %1716 = vperm.xlu0 %1715, %v124
    %v1717 = vpop.permute.xlu0 %1716
    %1719 = vset.pattern.permute.xlu0 4
    %1720 = vperm.xlu0 %1719, %v125
    %v1721 = vpop.permute.xlu0 %1720
    %1723 = vset.pattern.permute.xlu0 4
    %1724 = vperm.xlu0 %1723, %v126
    %v1725 = vpop.permute.xlu0 %1724
    %1727 = vset.pattern.permute.xlu0 4
    %1728 = vperm.xlu0 %1727, %v127
    %v1729 = vpop.permute.xlu0 %1728
    %1731 = vset.pattern.permute.xlu0 4
    %1732 = vperm.xlu0 %1731, %v128
    %v1733 = vpop.permute.xlu0 %1732
    %1735 = vset.pattern.permute.xlu0 4
    %1736 = vperm.xlu0 %1735, %v129
    %v1737 = vpop.permute.xlu0 %1736
    %1739 = vset.pattern.permute.xlu0 4
    %1740 = vperm.xlu0 %1739, %v130
    %v1741 = vpop.permute.xlu0 %1740
    %1743 = vset.pattern.permute.xlu0 4
    %1744 = vperm.xlu0 %1743, %v131
    %v1745 = vpop.permute.xlu0 %1744
    %1747 = vset.pattern.permute.xlu0 4
    %1748 = vperm.xlu0 %1747, %v132
    %v1749 = vpop.permute.xlu0 %1748
    %1751 = vset.pattern.permute.xlu0 4
    %1752 = vperm.xlu0 %1751, %v133
    %v1753 = vpop.permute.xlu0 %1752
    %1755 = vset.pattern.permute.xlu0 4
    %1756 = vperm.xlu0 %1755, %v134
    %v1757 = vpop.permute.xlu0 %1756
    %1759 = vset.pattern.permute.xlu0 4
    %1760 = vperm.xlu0 %1759, %v135
    %v1761 = vpop.permute.xlu0 %1760
    %1763 = vset.pattern.permute.xlu0 4
    %1764 = vperm.xlu0 %1763, %v136
    %v1765 = vpop.permute.xlu0 %1764
    %1767 = vset.pattern.permute.xlu0 4
    %1768 = vperm.xlu0 %1767, %v137
    %v1769 = vpop.permute.xlu0 %1768
    %1771 = vset.pattern.permute.xlu0 4
    %1772 = vperm.xlu0 %1771, %v138
    %v1773 = vpop.permute.xlu0 %1772
    %1775 = vset.pattern.permute.xlu0 4
    %1776 = vperm.xlu0 %1775, %v139
    %v1777 = vpop.permute.xlu0 %1776
    %1779 = vset.pattern.permute.xlu0 4
    %1780 = vperm.xlu0 %1779, %v140
    %v1781 = vpop.permute.xlu0 %1780
    %1783 = vset.pattern.permute.xlu0 4
    %1784 = vperm.xlu0 %1783, %v141
    %v1785 = vpop.permute.xlu0 %1784
    %1787 = vset.pattern.permute.xlu0 4
    %1788 = vperm.xlu0 %1787, %v142
    %v1789 = vpop.permute.xlu0 %1788
    %1791 = vset.pattern.permute.xlu0 4
    %1792 = vperm.xlu0 %1791, %v143
    %v1793 = vpop.permute.xlu0 %1792
    %1795 = vset.pattern.permute.xlu0 4
    %1796 = vperm.xlu0 %1795, %v144
    %v1797 = vpop.permute.xlu0 %1796
    %1799 = vset.pattern.permute.xlu0 4
    %1800 = vperm.xlu0 %1799, %v145
    %v1801 = vpop.permute.xlu0 %1800
    %1803 = vset.pattern.permute.xlu0 4
    %1804 = vperm.xlu0 %1803, %v146
    %v1805 = vpop.permute.xlu0 %1804
    %1807 = vset.pattern.permute.xlu0 4
    %1808 = vperm.xlu0 %1807, %v147
    %v1809 = vpop.permute.xlu0 %1808
    %1811 = vset.pattern.permute.xlu0 4
    %1812 = vperm.xlu0 %1811, %v148
    %v1813 = vpop.permute.xlu0 %1812
    %v1815 = vmul.f32 %v1654, %v1689
    %v1816 = vmul.f32 %v1655, %v1693
    %v1817 = vmul.f32 %v1656, %v1697
    %v1818 = vmul.f32 %v1657, %v1701
    %v1819 = vmul.f32 %v1658, %v1705
    %v1820 = vmul.f32 %v1659, %v1709
    %v1821 = vmul.f32 %v1660, %v1713
    %v1822 = vmul.f32 %v1661, %v1717
    %v1823 = vmul.f32 %v1662, %v1721
    %v1824 = vmul.f32 %v1663, %v1725
    %v1825 = vmul.f32 %v1664, %v1729
    %v1826 = vmul.f32 %v1665, %v1733
    %v1827 = vmul.f32 %v1666, %v1737
    %v1828 = vmul.f32 %v1667, %v1741
    %v1829 = vmul.f32 %v1668, %v1745
    %v1830 = vmul.f32 %v1669, %v1749
    %v1831 = vmul.f32 %v1670, %v1753
    %v1832 = vmul.f32 %v1671, %v1757
    %v1833 = vmul.f32 %v1672, %v1761
    %v1834 = vmul.f32 %v1673, %v1765
    %v1835 = vmul.f32 %v1674, %v1769
    %v1836 = vmul.f32 %v1675, %v1773
    %v1837 = vmul.f32 %v1676, %v1777
    %v1838 = vmul.f32 %v1677, %v1781
    %v1839 = vmul.f32 %v1678, %v1785
    %v1840 = vmul.f32 %v1679, %v1789
    %v1841 = vmul.f32 %v1680, %v1793
    %v1842 = vmul.f32 %v1681, %v1797
    %v1843 = vmul.f32 %v1682, %v1801
    %v1844 = vmul.f32 %v1683, %v1805
    %v1845 = vmul.f32 %v1684, %v1809
    %v1846 = vmul.f32 %v1685, %v1813
    %vm1847 = vcmask 23552
    %v1848 = vsel %vm1847, %v1815, 0.0
    %v1849 = vsel %vm1847, %v1816, 0.0
    %v1850 = vadd.f32 %v1848, %v1849
    %v1851 = vsel %vm1847, %v1817, 0.0
    %v1852 = vadd.f32 %v1850, %v1851
    %v1853 = vsel %vm1847, %v1818, 0.0
    %v1854 = vadd.f32 %v1852, %v1853
    %v1855 = vsel %vm1847, %v1819, 0.0
    %v1856 = vadd.f32 %v1854, %v1855
    %v1857 = vsel %vm1847, %v1820, 0.0
    %v1858 = vadd.f32 %v1856, %v1857
    %v1859 = vsel %vm1847, %v1821, 0.0
    %v1860 = vadd.f32 %v1858, %v1859
    %v1861 = vsel %vm1847, %v1822, 0.0
    %v1862 = vadd.f32 %v1860, %v1861
    %v1863 = vsel %vm1847, %v1823, 0.0
    %v1864 = vadd.f32 %v1862, %v1863
    %v1865 = vsel %vm1847, %v1824, 0.0
    %v1866 = vadd.f32 %v1864, %v1865
    %v1867 = vsel %vm1847, %v1825, 0.0
    %v1868 = vadd.f32 %v1866, %v1867
    %v1869 = vsel %vm1847, %v1826, 0.0
    %v1870 = vadd.f32 %v1868, %v1869
    %v1871 = vsel %vm1847, %v1827, 0.0
    %v1872 = vadd.f32 %v1870, %v1871
    %v1873 = vsel %vm1847, %v1828, 0.0
    %v1874 = vadd.f32 %v1872, %v1873
    %v1875 = vsel %vm1847, %v1829, 0.0
    %v1876 = vadd.f32 %v1874, %v1875
    %v1877 = vsel %vm1847, %v1830, 0.0
    %v1878 = vadd.f32 %v1876, %v1877
    %v1879 = vsel %vm1847, %v1831, 0.0
    %v1880 = vadd.f32 %v1878, %v1879
    %v1881 = vsel %vm1847, %v1832, 0.0
    %v1882 = vadd.f32 %v1880, %v1881
    %v1883 = vsel %vm1847, %v1833, 0.0
    %v1884 = vadd.f32 %v1882, %v1883
    %v1885 = vsel %vm1847, %v1834, 0.0
    %v1886 = vadd.f32 %v1884, %v1885
    %v1887 = vsel %vm1847, %v1835, 0.0
    %v1888 = vadd.f32 %v1886, %v1887
    %v1889 = vsel %vm1847, %v1836, 0.0
    %v1890 = vadd.f32 %v1888, %v1889
    %v1891 = vsel %vm1847, %v1837, 0.0
    %v1892 = vadd.f32 %v1890, %v1891
    %v1893 = vsel %vm1847, %v1838, 0.0
    %v1894 = vadd.f32 %v1892, %v1893
    %v1895 = vsel %vm1847, %v1839, 0.0
    %v1896 = vadd.f32 %v1894, %v1895
    %v1897 = vsel %vm1847, %v1840, 0.0
    %v1898 = vadd.f32 %v1896, %v1897
    %v1899 = vsel %vm1847, %v1841, 0.0
    %v1900 = vadd.f32 %v1898, %v1899
    %v1901 = vsel %vm1847, %v1842, 0.0
    %v1902 = vadd.f32 %v1900, %v1901
    %v1903 = vsel %vm1847, %v1843, 0.0
    %v1904 = vadd.f32 %v1902, %v1903
    %v1905 = vsel %vm1847, %v1844, 0.0
    %v1906 = vadd.f32 %v1904, %v1905
    %v1907 = vsel %vm1847, %v1845, 0.0
    %v1908 = vadd.f32 %v1906, %v1907
    %v1909 = vsel %vm1847, %v1846, 0.0
    %v1910 = vadd.f32 %v1908, %v1909
    %v1911 = vrot.slane %v1910, 4
    %v1912 = vadd.f32 %v1910, %v1911
    %v1913 = vrot.slane %v1912, 2
    %v1914 = vadd.f32 %v1912, %v1913
    %v1915 = vrot.slane %v1914, 1
    %v1916 = vadd.f32 %v1914, %v1915
    %v1917 = vadd.f32 %v1686, %v1916
    %vm1918 = vcmask 16384
    %1919 = vst.msk [vmem:[#allocation4] sm:$0x1] %vm1918, %v1917
    %v1920 = vld [vmem:[#allocation6] sm:$0x1]
    %v1921 = vmul.f32 %v1142, %v1689
    %v1922 = vmul.f32 %v1143, %v1693
    %v1923 = vmul.f32 %v1144, %v1697
    %v1924 = vmul.f32 %v1145, %v1701
    %v1925 = vmul.f32 %v1146, %v1705
    %v1926 = vmul.f32 %v1147, %v1709
    %v1927 = vmul.f32 %v1148, %v1713
    %v1928 = vmul.f32 %v1149, %v1717
    %v1929 = vmul.f32 %v1150, %v1721
    %v1930 = vmul.f32 %v1151, %v1725
    %v1931 = vmul.f32 %v1152, %v1729
    %v1932 = vmul.f32 %v1153, %v1733
    %v1933 = vmul.f32 %v1154, %v1737
    %v1934 = vmul.f32 %v1155, %v1741
    %v1935 = vmul.f32 %v1156, %v1745
    %v1936 = vmul.f32 %v1157, %v1749
    %v1937 = vmul.f32 %v1158, %v1753
    %v1938 = vmul.f32 %v1159, %v1757
    %v1939 = vmul.f32 %v1160, %v1761
    %v1940 = vmul.f32 %v1161, %v1765
    %v1941 = vmul.f32 %v1162, %v1769
    %v1942 = vmul.f32 %v1163, %v1773
    %v1943 = vmul.f32 %v1164, %v1777
    %v1944 = vmul.f32 %v1165, %v1781
    %v1945 = vmul.f32 %v1166, %v1785
    %v1946 = vmul.f32 %v1167, %v1789
    %v1947 = vmul.f32 %v1168, %v1793
    %v1948 = vmul.f32 %v1169, %v1797
    %v1949 = vmul.f32 %v1170, %v1801
    %v1950 = vmul.f32 %v1171, %v1805
    %v1951 = vmul.f32 %v1172, %v1809
    %v1952 = vmul.f32 %v1173, %v1813
    %v1953 = vsel %vm1847, %v1921, 0.0
    %v1954 = vsel %vm1847, %v1922, 0.0
    %v1955 = vadd.f32 %v1953, %v1954
    %v1956 = vsel %vm1847, %v1923, 0.0
    %v1957 = vadd.f32 %v1955, %v1956
    %v1958 = vsel %vm1847, %v1924, 0.0
    %v1959 = vadd.f32 %v1957, %v1958
    %v1960 = vsel %vm1847, %v1925, 0.0
    %v1961 = vadd.f32 %v1959, %v1960
    %v1962 = vsel %vm1847, %v1926, 0.0
    %v1963 = vadd.f32 %v1961, %v1962
    %v1964 = vsel %vm1847, %v1927, 0.0
    %v1965 = vadd.f32 %v1963, %v1964
    %v1966 = vsel %vm1847, %v1928, 0.0
    %v1967 = vadd.f32 %v1965, %v1966
    %v1968 = vsel %vm1847, %v1929, 0.0
    %v1969 = vadd.f32 %v1967, %v1968
    %v1970 = vsel %vm1847, %v1930, 0.0
    %v1971 = vadd.f32 %v1969, %v1970
    %v1972 = vsel %vm1847, %v1931, 0.0
    %v1973 = vadd.f32 %v1971, %v1972
    %v1974 = vsel %vm1847, %v1932, 0.0
    %v1975 = vadd.f32 %v1973, %v1974
    %v1976 = vsel %vm1847, %v1933, 0.0
    %v1977 = vadd.f32 %v1975, %v1976
    %v1978 = vsel %vm1847, %v1934, 0.0
    %v1979 = vadd.f32 %v1977, %v1978
    %v1980 = vsel %vm1847, %v1935, 0.0
    %v1981 = vadd.f32 %v1979, %v1980
    %v1982 = vsel %vm1847, %v1936, 0.0
    %v1983 = vadd.f32 %v1981, %v1982
    %v1984 = vsel %vm1847, %v1937, 0.0
    %v1985 = vadd.f32 %v1983, %v1984
    %v1986 = vsel %vm1847, %v1938, 0.0
    %v1987 = vadd.f32 %v1985, %v1986
    %v1988 = vsel %vm1847, %v1939, 0.0
    %v1989 = vadd.f32 %v1987, %v1988
    %v1990 = vsel %vm1847, %v1940, 0.0
    %v1991 = vadd.f32 %v1989, %v1990
    %v1992 = vsel %vm1847, %v1941, 0.0
    %v1993 = vadd.f32 %v1991, %v1992
    %v1994 = vsel %vm1847, %v1942, 0.0
    %v1995 = vadd.f32 %v1993, %v1994
    %v1996 = vsel %vm1847, %v1943, 0.0
    %v1997 = vadd.f32 %v1995, %v1996
    %v1998 = vsel %vm1847, %v1944, 0.0
    %v1999 = vadd.f32 %v1997, %v1998
    %v2000 = vsel %vm1847, %v1945, 0.0
    %v2001 = vadd.f32 %v1999, %v2000
    %v2002 = vsel %vm1847, %v1946, 0.0
    %v2003 = vadd.f32 %v2001, %v2002
    %v2004 = vsel %vm1847, %v1947, 0.0
    %v2005 = vadd.f32 %v2003, %v2004
    %v2006 = vsel %vm1847, %v1948, 0.0
    %v2007 = vadd.f32 %v2005, %v2006
    %v2008 = vsel %vm1847, %v1949, 0.0
    %v2009 = vadd.f32 %v2007, %v2008
    %v2010 = vsel %vm1847, %v1950, 0.0
    %v2011 = vadd.f32 %v2009, %v2010
    %v2012 = vsel %vm1847, %v1951, 0.0
    %v2013 = vadd.f32 %v2011, %v2012
    %v2014 = vsel %vm1847, %v1952, 0.0
    %v2015 = vadd.f32 %v2013, %v2014
    %v2016 = vrot.slane %v2015, 4
    %v2017 = vadd.f32 %v2015, %v2016
    %v2018 = vrot.slane %v2017, 2
    %v2019 = vadd.f32 %v2017, %v2018
    %v2020 = vrot.slane %v2019, 1
    %v2021 = vadd.f32 %v2019, %v2020
    %v2022 = vadd.f32 %v1920, %v2021
    %2023 = vst.msk [vmem:[#allocation6] sm:$0x1] %vm1918, %v2022
    %v2024 = vld [vmem:[#allocation7] sm:$0x1]
    %vm2025 = vcmask 39968
    %v2026 = vsel %vm2025, %v117, 0.0
    %v2027 = vsel %vm2025, %v118, 0.0
    %v2028 = vadd.f32 %v2026, %v2027
    %v2029 = vsel %vm2025, %v119, 0.0
    %v2030 = vadd.f32 %v2028, %v2029
    %v2031 = vsel %vm2025, %v120, 0.0
    %v2032 = vadd.f32 %v2030, %v2031
    %v2033 = vsel %vm2025, %v121, 0.0
    %v2034 = vadd.f32 %v2032, %v2033
    %v2035 = vsel %vm2025, %v122, 0.0
    %v2036 = vadd.f32 %v2034, %v2035
    %v2037 = vsel %vm2025, %v123, 0.0
    %v2038 = vadd.f32 %v2036, %v2037
    %v2039 = vsel %vm2025, %v124, 0.0
    %v2040 = vadd.f32 %v2038, %v2039
    %v2041 = vsel %vm2025, %v125, 0.0
    %v2042 = vadd.f32 %v2040, %v2041
    %v2043 = vsel %vm2025, %v126, 0.0
    %v2044 = vadd.f32 %v2042, %v2043
    %v2045 = vsel %vm2025, %v127, 0.0
    %v2046 = vadd.f32 %v2044, %v2045
    %v2047 = vsel %vm2025, %v128, 0.0
    %v2048 = vadd.f32 %v2046, %v2047
    %v2049 = vsel %vm2025, %v129, 0.0
    %v2050 = vadd.f32 %v2048, %v2049
    %v2051 = vsel %vm2025, %v130, 0.0
    %v2052 = vadd.f32 %v2050, %v2051
    %v2053 = vsel %vm2025, %v131, 0.0
    %v2054 = vadd.f32 %v2052, %v2053
    %v2055 = vsel %vm2025, %v132, 0.0
    %v2056 = vadd.f32 %v2054, %v2055
    %v2057 = vsel %vm2025, %v133, 0.0
    %v2058 = vadd.f32 %v2056, %v2057
    %v2059 = vsel %vm2025, %v134, 0.0
    %v2060 = vadd.f32 %v2058, %v2059
    %v2061 = vsel %vm2025, %v135, 0.0
    %v2062 = vadd.f32 %v2060, %v2061
    %v2063 = vsel %vm2025, %v136, 0.0
    %v2064 = vadd.f32 %v2062, %v2063
    %v2065 = vsel %vm2025, %v137, 0.0
    %v2066 = vadd.f32 %v2064, %v2065
    %v2067 = vsel %vm2025, %v138, 0.0
    %v2068 = vadd.f32 %v2066, %v2067
    %v2069 = vsel %vm2025, %v139, 0.0
    %v2070 = vadd.f32 %v2068, %v2069
    %v2071 = vsel %vm2025, %v140, 0.0
    %v2072 = vadd.f32 %v2070, %v2071
    %v2073 = vsel %vm2025, %v141, 0.0
    %v2074 = vadd.f32 %v2072, %v2073
    %v2075 = vsel %vm2025, %v142, 0.0
    %v2076 = vadd.f32 %v2074, %v2075
    %v2077 = vsel %vm2025, %v143, 0.0
    %v2078 = vadd.f32 %v2076, %v2077
    %v2079 = vsel %vm2025, %v144, 0.0
    %v2080 = vadd.f32 %v2078, %v2079
    %v2081 = vsel %vm2025, %v145, 0.0
    %v2082 = vadd.f32 %v2080, %v2081
    %v2083 = vsel %vm2025, %v146, 0.0
    %v2084 = vadd.f32 %v2082, %v2083
    %v2085 = vsel %vm2025, %v147, 0.0
    %v2086 = vadd.f32 %v2084, %v2085
    %v2087 = vsel %vm2025, %v148, 0.0
    %v2088 = vadd.f32 %v2086, %v2087
    %v2089 = vrot.slane %v2088, 4
    %v2090 = vadd.f32 %v2088, %v2089
    %v2091 = vrot.slane %v2090, 2
    %v2092 = vadd.f32 %v2090, %v2091
    %v2093 = vrot.slane %v2092, 1
    %v2094 = vadd.f32 %v2092, %v2093
    %v2097 = vunpack.c.l.s4 1966171168
    %v2098 = vunpack.c.0.s8 %v2097
    %v2099 = vlaneseq
    %v2100 = vshrl.u32 %v2099, 7
    %v2101 = vsub.s32 %v2098, %v2100
    %v2102 = vrot.slane %v2094, %v2101
    %v2104 = vunpack.c.l.s4 1966171168
    %v2105 = vunpack.c.0.s8 %v2104
    %v2106 = vlaneseq
    %v2107 = vshrl.u32 %v2106, 7
    %v2108 = vsub.s32 %v2105, %v2107
    %v2109 = vrot.slane %v2102, %v2108
    %2110 = vrot.lane.b32.xlu0 %v2109, 124
    %v2111 = vpop.permute.xlu0 %2110
    %v2113 = vadd.f32 %v2024, %v2111
    %vm2114 = vcmask 0
    %2115 = vst.msk [vmem:[#allocation7] sm:$0x1] %vm2114, %v2113
    // Predicated region
    $region30: #{tpu_custom_call.1} parent=1 // pred_check
      _
    $region31: #{tpu_custom_call.1} parent=1 // pred_check_branch
      %2117 = sbr.rel (0) target = $region33
    $region32: #{tpu_custom_call.1} parent=1 // pred_region
      %s2118 = sadd.s32 0, 0
      %s2119 = smul.u32 2, %s2118
      %s2121 = ssub.s32 128, 128
      %2122 = vsyncadd [#allocation3], %s2121
      %s2123 = smul.addr %s2119, 64
      %s2124 = scalar_lea.hbm %s6, %s2123
      %s2126 = sshll.u32 [#allocation2], 4
      %s2127 = int_to_ptr.vmem [resolvable:$true] %s2126
      %2129 = dma.vmem_to_hbm [thread:$0]  %s2127, 128, %s2124, [#allocation3]
    $region33: #{tpu_custom_call.1} parent=1 // pred_fallthru
      _
    // Predicated region
    $region34: #{tpu_custom_call.1} parent=1 // pred_check
      _
    $region35: #{tpu_custom_call.1} parent=1 // pred_check_branch
      %2131 = sbr.rel (0) target = $region37
    $region36: #{tpu_custom_call.1} parent=1 // pred_region
      %s2133 = ssub.s32 16, 16
      %2134 = vsyncadd [#allocation5], %s2133
      %s2136 = sshll.u32 [#allocation4], 4
      %s2137 = int_to_ptr.vmem [resolvable:$true] %s2136
      %2139 = dma.vmem_to_hbm [thread:$0]  %s2137, 16, %s7, [#allocation5]
    $region37: #{tpu_custom_call.1} parent=1 // pred_fallthru
      _
    // Predicated region
    $region38: #{tpu_custom_call.1} parent=1 // pred_check
      _
    $region39: #{tpu_custom_call.1} parent=1 // pred_check_branch
      %2141 = sbr.rel (0) target = $region41
    $region40: #{tpu_custom_call.1} parent=1 // pred_region
      %s2143 = ssub.s32 16, 16
      %2144 = vsyncadd [#allocation5], %s2143
      %s2146 = sshll.u32 [#allocation6], 4
      %s2147 = int_to_ptr.vmem [resolvable:$true] %s2146
      %2149 = dma.vmem_to_hbm [thread:$0]  %s2147, 16, %s8, [#allocation5]
    $region41: #{tpu_custom_call.1} parent=1 // pred_fallthru
      _
    // Predicated region
    $region42: #{tpu_custom_call.1} parent=1 // pred_check
      _
    $region43: #{tpu_custom_call.1} parent=1 // pred_check_branch
      %2151 = sbr.rel (0) target = $region45
    $region44: #{tpu_custom_call.1} parent=1 // pred_region
      %s2153 = ssub.s32 16, 16
      %2154 = vsyncadd [#allocation8], %s2153
      %s2156 = sshll.u32 [#allocation7], 4
      %s2157 = int_to_ptr.vmem [resolvable:$true] %s2156
      %2159 = dma.vmem_to_hbm [thread:$0]  %s2157, 16, %s9, [#allocation8]
    $region45: #{tpu_custom_call.1} parent=1 // pred_fallthru
      _
    // Predicated region
    $region46: #{tpu_custom_call.1} parent=1 // pred_check
      _
    $region47: #{tpu_custom_call.1} parent=1 // pred_check_branch
      %2161 = sbr.rel (0) target = $region49
    $region48: #{tpu_custom_call.1} parent=1 // pred_region
      %2162 = dma.done [#allocation3], 128
    $region49: #{tpu_custom_call.1} parent=1 // pred_fallthru
      _
    // Predicated region
    $region50: #{tpu_custom_call.1} parent=1 // pred_check
      _
    $region51: #{tpu_custom_call.1} parent=1 // pred_check_branch
      %2164 = sbr.rel (0) target = $region53
    $region52: #{tpu_custom_call.1} parent=1 // pred_region
      %2165 = dma.done [#allocation5], 16
    $region53: #{tpu_custom_call.1} parent=1 // pred_fallthru
      _
    // Predicated region
    $region54: #{tpu_custom_call.1} parent=1 // pred_check
      _
    $region55: #{tpu_custom_call.1} parent=1 // pred_check_branch
      %2167 = sbr.rel (0) target = $region57
    $region56: #{tpu_custom_call.1} parent=1 // pred_region
      %2168 = dma.done [#allocation5], 16
    $region57: #{tpu_custom_call.1} parent=1 // pred_fallthru
      _
    // Predicated region
    $region58: #{tpu_custom_call.1} parent=1 // pred_check
      _
    $region59: #{tpu_custom_call.1} parent=1 // pred_check_branch
      %2170 = sbr.rel (0) target = $region61
    $region60: #{tpu_custom_call.1} parent=1 // pred_region
      %2171 = dma.done [#allocation8], 16
    $region61: #{tpu_custom_call.1} parent=1 // pred_fallthru
      _
    %2172 = vsyncpa [#allocation3], 1
    %2173 = vsyncpa [#allocation5], 1
    %2174 = vsyncpa [#allocation8], 1

</llo_original>
